<compile_context>
chip_gen: v7x
topology: tpu7x:2x2x1
jax: 0.10.0
libtpu: 0.0.40
codegen_flags: <defaults>
</compile_context>

<pallas_src>
import math
import numpy as np
import jax
import jax.numpy as jnp
from jax.experimental import pallas as pl
from jax.experimental.pallas import tpu as pltpu

WINDOW_SIZE = 11
SIGMA = 1.5
PAD = WINDOW_SIZE // 2
C1 = 0.01 ** 2
C2 = 0.03 ** 2


def _gaussian_1d(window_size, sigma):
    # Identical to the PyTorch `gaussian()` helper (then normalized).
    g = np.array(
        [math.exp(-((x - window_size // 2) ** 2) / float(2 * sigma ** 2))
         for x in range(window_size)],
        dtype=np.float64,
    )
    return g / g.sum()


GAUSS = _gaussian_1d(WINDOW_SIZE, SIGMA)


def _gauss_conv_matrix(n):
    """Banded matrix M (n, n) such that (x @ M)[..., w] equals the 1-D Gaussian
    convolution of x along its last axis with zero padding of PAD (F.conv2d
    padding semantics).  M[j, w] = G[j - w + PAD] for |j - w| <= PAD."""
    m = np.zeros((n, n), dtype=np.float64)
    for w in range(n):                 # output index
        for dx in range(WINDOW_SIZE):
            j = w + dx - PAD           # input index; out-of-range == zero pad
            if 0 <= j < n:
                m[j, w] = GAUSS[dx]
    return m


def _round_up(v, m):
    return ((v + m - 1) // m) * m


def _pick_planes_per_block(num_planes, height, width):
    """Choose TB = planes per grid step: the largest divisor of num_planes whose
    tile keeps the sublane block dim 8-aligned (or covers the full array) and
    whose estimated VMEM live set fits the budget."""
    w_pad = _round_up(width, 128)
    best = None
    for tb in range(1, num_planes + 1):
        if num_planes % tb:
            continue
        rows = tb * height
        if rows % 8 != 0 and tb != num_planes:
            continue                     # would violate (8,128) tiling on a partial block
        rows_pad = _round_up(rows, 8)
        # rough live set: 2 dbl-buffered inputs + ~8 f32 intermediates + conv matrices (x2)
        live = ((2 * 2 + 8) * rows_pad * w_pad * 4
                + 2 * rows_pad * rows_pad * 4
                + 2 * w_pad * w_pad * 4)
        if rows <= 512 and live <= (24 << 20):
            best = tb                    # keep the largest feasible tile
    if best is None:
        # fall back to the smallest legal block shape
        for tb in range(1, num_planes + 1):
            if num_planes % tb:
                continue
            if (tb * height) % 8 == 0 or tb == num_planes:
                best = tb
                break
    return best


def _ssim_block_kernel(x1_ref, x2_ref, mw_ref, mh_ref, psum_ref):
    x1 = x1_ref[...]          # (TB*H, W) f32
    x2 = x2_ref[...]
    mw = mw_ref[...]          # (W, W)        lane-axis Gaussian conv matrix
    mh = mh_ref[...]          # (TB*H, TB*H)  block-diagonal sublane-axis conv matrix

    def gauss_blur(z):
        # Separable 11x11 Gaussian filter as two MXU matmuls; zero padding is
        # encoded in the band truncation of mw / mh.
        t = jnp.dot(z, mw, preferred_element_type=jnp.float32)     # along W
        return jnp.dot(mh, t, preferred_element_type=jnp.float32)  # along H (per plane)

    mu1 = gauss_blur(x1)
    mu2 = gauss_blur(x2)
    e11 = gauss_blur(x1 * x1)
    e22 = gauss_blur(x2 * x2)
    e12 = gauss_blur(x1 * x2)

    mu1_sq = mu1 * mu1
    mu2_sq = mu2 * mu2
    mu1_mu2 = mu1 * mu2
    sigma1_sq = e11 - mu1_sq
    sigma2_sq = e22 - mu2_sq
    sigma12 = e12 - mu1_mu2

    num = (2.0 * mu1_mu2 + C1) * (2.0 * sigma12 + C2)
    den = (mu1_sq + mu2_sq + C1) * (sigma1_sq + sigma2_sq + C2)
    ssim_map = num / den

    # Per-block partial sum, broadcast to a lane-dense (1, 8, 128) output tile.
    psum_ref[...] = jnp.broadcast_to(jnp.sum(ssim_map), psum_ref.shape)


def ssim(img1, img2):
    """SSIM.forward(img1, img2) with window_size=11, size_average=True."""
    assert img1.shape == img2.shape and img1.ndim == 4
    N, C, H, W = img1.shape
    B = N * C

    # NCHW -> plane stack (B*H, W); no explicit padding (baked into conv matrices).
    x1 = img1.reshape(B * H, W).astype(jnp.float32)
    x2 = img2.reshape(B * H, W).astype(jnp.float32)

    tb = _pick_planes_per_block(B, H, W)
    rows = tb * H
    num_blocks = B // tb

    m_w = jnp.asarray(_gauss_conv_matrix(W), dtype=jnp.float32)
    th = _gauss_conv_matrix(H).T                       # (symmetric, but be explicit)
    m_h = jnp.asarray(np.kron(np.eye(tb), th), dtype=jnp.float32)

    grid_spec = pltpu.PrefetchScalarGridSpec(
        num_scalar_prefetch=0,
        grid=(num_blocks,),
        in_specs=[
            pl.BlockSpec((rows, W), lambda b: (b, 0)),      # img1 planes tile
            pl.BlockSpec((rows, W), lambda b: (b, 0)),      # img2 planes tile
            pl.BlockSpec((W, W), lambda b: (0, 0)),         # row-conv matrix (resident)
            pl.BlockSpec((rows, rows), lambda b: (0, 0)),   # col-conv matrix (resident)
        ],
        out_specs=pl.BlockSpec((1, 8, 128), lambda b: (b, 0, 0)),
    )

    partials = pl.pallas_call(
        _ssim_block_kernel,
        out_shape=jax.ShapeDtypeStruct((num_blocks, 8, 128), jnp.float32),
        grid_spec=grid_spec,
        compiler_params=pltpu.CompilerParams(
            dimension_semantics=("parallel",),
            vmem_limit_bytes=48 * 1024 * 1024,
        ),
    )(x1, x2, m_w, m_h)

    total = jnp.sum(partials[:, 0, 0])
    return total / (N * C * H * W)       # size_average=True -> mean over all elements


if __name__ == "__main__":
    key = jax.random.PRNGKey(0)
    k1, k2 = jax.random.split(key)
    img1 = jax.random.uniform(k1, (2, 4, 16, 16), dtype=jnp.float32)
    img2 = jax.random.uniform(k2, (2, 4, 16, 16), dtype=jnp.float32)

    val = ssim(img1, img2)
    jax.block_until_ready(val)

    # Sanity: SSIM of an image with itself is exactly 1 (num == den bitwise).
    one = ssim(img1, img1)
    jax.block_until_ready(one)
    assert abs(float(one) - 1.0) < 1e-3, float(one)
    assert -1.0 <= float(val) <= 1.0, float(val)

    print("KERNEL_OK")
</pallas_src>

<mosaic_0001>
module attributes {stable_mosaic.version = 11 : i64} {
  func.func @_ssim_block_kernel(%arg0: i32, %arg1: memref<128x16xf32, #tpu.memory_space<vmem>>, %arg2: memref<128x16xf32, #tpu.memory_space<vmem>>, %arg3: memref<16x16xf32, #tpu.memory_space<vmem>>, %arg4: memref<128x128xf32, #tpu.memory_space<vmem>>, %arg5: memref<1x8x128xf32, #tpu.memory_space<vmem>>) attributes {dimension_semantics = [#tpu.dimension_semantics<parallel>], iteration_bounds = array<i64: 1>, scalar_prefetch = 0 : i64, scratch_operands = 0 : i64, tpu.core_type = #tpu.core_type<tc>, window_params = [{transform_indices = @transform_0, window_bounds = array<i64: 128, 16>}, {transform_indices = @transform_1, window_bounds = array<i64: 128, 16>}, {pipeline_mode = #tpu.pipeline_mode<synchronous>, transform_indices = @transform_2, window_bounds = array<i64: 16, 16>}, {pipeline_mode = #tpu.pipeline_mode<synchronous>, transform_indices = @transform_3, window_bounds = array<i64: 128, 128>}, {transform_indices = @transform_4, window_bounds = array<i64: 1, 8, 128>}]} {
    %c0 = arith.constant 0 : index
    %c0_0 = arith.constant 0 : index
    %0 = vector.load %arg1[%c0, %c0_0] : memref<128x16xf32, #tpu.memory_space<vmem>>, vector<128x16xf32>
    %c0_1 = arith.constant 0 : index
    %c0_2 = arith.constant 0 : index
    %1 = vector.load %arg2[%c0_1, %c0_2] : memref<128x16xf32, #tpu.memory_space<vmem>>, vector<128x16xf32>
    %c0_3 = arith.constant 0 : index
    %c0_4 = arith.constant 0 : index
    %2 = vector.load %arg3[%c0_3, %c0_4] : memref<16x16xf32, #tpu.memory_space<vmem>>, vector<16x16xf32>
    %c0_5 = arith.constant 0 : index
    %c0_6 = arith.constant 0 : index
    %3 = vector.load %arg4[%c0_5, %c0_6] : memref<128x128xf32, #tpu.memory_space<vmem>>, vector<128x128xf32>
    %cst = arith.constant dense<0.000000e+00> : vector<128x16xf32>
    %4 = tpu.matmul %0, %2, %cst {dimension_numbers = #tpu.dot_dimension_numbers<[1], [0], [0], [1], [0, 0, 1, 1], [], []>} : vector<128x16xf32>, vector<16x16xf32>, vector<128x16xf32> -> vector<128x16xf32>
    %cst_7 = arith.constant dense<0.000000e+00> : vector<128x16xf32>
    %5 = tpu.matmul %3, %4, %cst_7 {dimension_numbers = #tpu.dot_dimension_numbers<[1], [0], [0], [1], [0, 0, 1, 1], [], []>} : vector<128x128xf32>, vector<128x16xf32>, vector<128x16xf32> -> vector<128x16xf32>
    %cst_8 = arith.constant dense<0.000000e+00> : vector<128x16xf32>
    %6 = tpu.matmul %1, %2, %cst_8 {dimension_numbers = #tpu.dot_dimension_numbers<[1], [0], [0], [1], [0, 0, 1, 1], [], []>} : vector<128x16xf32>, vector<16x16xf32>, vector<128x16xf32> -> vector<128x16xf32>
    %cst_9 = arith.constant dense<0.000000e+00> : vector<128x16xf32>
    %7 = tpu.matmul %3, %6, %cst_9 {dimension_numbers = #tpu.dot_dimension_numbers<[1], [0], [0], [1], [0, 0, 1, 1], [], []>} : vector<128x128xf32>, vector<128x16xf32>, vector<128x16xf32> -> vector<128x16xf32>
    %8 = arith.mulf %0, %0 : vector<128x16xf32>
    %cst_10 = arith.constant dense<0.000000e+00> : vector<128x16xf32>
    %9 = tpu.matmul %8, %2, %cst_10 {dimension_numbers = #tpu.dot_dimension_numbers<[1], [0], [0], [1], [0, 0, 1, 1], [], []>} : vector<128x16xf32>, vector<16x16xf32>, vector<128x16xf32> -> vector<128x16xf32>
    %cst_11 = arith.constant dense<0.000000e+00> : vector<128x16xf32>
    %10 = tpu.matmul %3, %9, %cst_11 {dimension_numbers = #tpu.dot_dimension_numbers<[1], [0], [0], [1], [0, 0, 1, 1], [], []>} : vector<128x128xf32>, vector<128x16xf32>, vector<128x16xf32> -> vector<128x16xf32>
    %11 = arith.mulf %1, %1 : vector<128x16xf32>
    %cst_12 = arith.constant dense<0.000000e+00> : vector<128x16xf32>
    %12 = tpu.matmul %11, %2, %cst_12 {dimension_numbers = #tpu.dot_dimension_numbers<[1], [0], [0], [1], [0, 0, 1, 1], [], []>} : vector<128x16xf32>, vector<16x16xf32>, vector<128x16xf32> -> vector<128x16xf32>
    %cst_13 = arith.constant dense<0.000000e+00> : vector<128x16xf32>
    %13 = tpu.matmul %3, %12, %cst_13 {dimension_numbers = #tpu.dot_dimension_numbers<[1], [0], [0], [1], [0, 0, 1, 1], [], []>} : vector<128x128xf32>, vector<128x16xf32>, vector<128x16xf32> -> vector<128x16xf32>
    %14 = arith.mulf %0, %1 : vector<128x16xf32>
    %cst_14 = arith.constant dense<0.000000e+00> : vector<128x16xf32>
    %15 = tpu.matmul %14, %2, %cst_14 {dimension_numbers = #tpu.dot_dimension_numbers<[1], [0], [0], [1], [0, 0, 1, 1], [], []>} : vector<128x16xf32>, vector<16x16xf32>, vector<128x16xf32> -> vector<128x16xf32>
    %cst_15 = arith.constant dense<0.000000e+00> : vector<128x16xf32>
    %16 = tpu.matmul %3, %15, %cst_15 {dimension_numbers = #tpu.dot_dimension_numbers<[1], [0], [0], [1], [0, 0, 1, 1], [], []>} : vector<128x128xf32>, vector<128x16xf32>, vector<128x16xf32> -> vector<128x16xf32>
    %17 = arith.mulf %5, %5 : vector<128x16xf32>
    %18 = arith.mulf %7, %7 : vector<128x16xf32>
    %19 = arith.mulf %5, %7 : vector<128x16xf32>
    %20 = arith.subf %10, %17 : vector<128x16xf32>
    %21 = arith.subf %13, %18 : vector<128x16xf32>
    %22 = arith.subf %16, %19 : vector<128x16xf32>
    %cst_16 = arith.constant 2.000000e+00 : f32
    %23 = vector.broadcast %cst_16 : f32 to vector<128x16xf32>
    %24 = arith.mulf %23, %19 : vector<128x16xf32>
    %cst_17 = arith.constant 9.99999974E-5 : f32
    %25 = vector.broadcast %cst_17 : f32 to vector<128x16xf32>
    %26 = arith.addf %24, %25 : vector<128x16xf32>
    %cst_18 = arith.constant 2.000000e+00 : f32
    %27 = vector.broadcast %cst_18 : f32 to vector<128x16xf32>
    %28 = arith.mulf %27, %22 : vector<128x16xf32>
    %cst_19 = arith.constant 8.99999984E-4 : f32
    %29 = vector.broadcast %cst_19 : f32 to vector<128x16xf32>
    %30 = arith.addf %28, %29 : vector<128x16xf32>
    %31 = arith.mulf %26, %30 : vector<128x16xf32>
    %32 = arith.addf %17, %18 : vector<128x16xf32>
    %cst_20 = arith.constant 9.99999974E-5 : f32
    %33 = vector.broadcast %cst_20 : f32 to vector<128x16xf32>
    %34 = arith.addf %32, %33 : vector<128x16xf32>
    %35 = arith.addf %20, %21 : vector<128x16xf32>
    %cst_21 = arith.constant 8.99999984E-4 : f32
    %36 = vector.broadcast %cst_21 : f32 to vector<128x16xf32>
    %37 = arith.addf %35, %36 : vector<128x16xf32>
    %38 = arith.mulf %34, %37 : vector<128x16xf32>
    %39 = arith.divf %31, %38 : vector<128x16xf32>
    %40 = vector.shape_cast %39 : vector<128x16xf32> to vector<1x128x16xf32>
    %cst_22 = arith.constant dense<0.000000e+00> : vector<1xf32>
    %41 = vector.multi_reduction <add>, %40, %cst_22 [1, 2] : vector<1x128x16xf32> to vector<1xf32>
    %42 = vector.shape_cast %41 : vector<1xf32> to vector<1x1x1xf32>
    %43 = vector.extract %42[0, 0, 0] : f32 from vector<1x1x1xf32>
    %44 = vector.broadcast %43 : f32 to vector<1x8x128xf32>
    %c0_23 = arith.constant 0 : index
    %c0_24 = arith.constant 0 : index
    %c0_25 = arith.constant 0 : index
    %45 = vector.load %arg5[%c0_23, %c0_24, %c0_25] : memref<1x8x128xf32, #tpu.memory_space<vmem>>, vector<1x8x128xf32>
    tpu.vector_store %arg5[%c0_23, %c0_24, %c0_25], %44 {strides = array<i32>} : memref<1x8x128xf32, #tpu.memory_space<vmem>>, vector<1x8x128xf32>,
    return
  }
  func.func @transform_0(%arg0: i32) -> (i32, i32) {
    %c0_i32 = arith.constant 0 : i32
    %c0_i32_0 = arith.constant 0 : i32
    return %arg0, %c0_i32 : i32, i32
  }
  func.func @transform_1(%arg0: i32) -> (i32, i32) {
    %c0_i32 = arith.constant 0 : i32
    %c0_i32_0 = arith.constant 0 : i32
    return %arg0, %c0_i32 : i32, i32
  }
  func.func @transform_2(%arg0: i32) -> (i32, i32) {
    %c0_i32 = arith.constant 0 : i32
    %c0_i32_0 = arith.constant 0 : i32
    %c0_i32_1 = arith.constant 0 : i32
    return %c0_i32, %c0_i32_0 : i32, i32
  }
  func.func @transform_3(%arg0: i32) -> (i32, i32) {
    %c0_i32 = arith.constant 0 : i32
    %c0_i32_0 = arith.constant 0 : i32
    %c0_i32_1 = arith.constant 0 : i32
    return %c0_i32, %c0_i32_0 : i32, i32
  }
  func.func @transform_4(%arg0: i32) -> (i32, i32, i32) {
    %c0_i32 = arith.constant 0 : i32
    %c0_i32_0 = arith.constant 0 : i32
    %c0_i32_1 = arith.constant 0 : i32
    return %arg0, %c0_i32, %c0_i32_0 : i32, i32, i32
  }
}

</mosaic_0001>

<llo_original>
// kernel: tpu_custom_call.1
$region0: #{tpu_custom_call.1}
  #allocation0 [shape = 'u32[]', space=smem, size = 0x4, offset = 0x4, fixed_abs, tag = 'smem constant byte address 0x4 - core index']
  #allocation1 [shape = 'u32[144,128]{1,0:T(1,128)}', space=vmem, size = 0x12000, scoped, tag = 'internal scratch']
  %s0 = inlined_call_operand.vmem [shape: f32[128,16], index: 0, kind: input, shape index: {}]
  %s1 = inlined_call_operand.vmem [shape: f32[128,16], index: 1, kind: input, shape index: {}]
  %s2 = inlined_call_operand.vmem [shape: f32[16,16], index: 2, kind: input, shape index: {}]
  %s3 = inlined_call_operand.vmem [shape: f32[128,128], index: 3, kind: input, shape index: {}]
  %s4 = inlined_call_operand.hbm [shape: f32[1,8,128], index: 4, kind: output, shape index: {}]
  %s5 = sld [smem:[#allocation0]]
  $region26: #{tpu_custom_call.1} parent=0
    _
  %s7 = ssub.s32 1, %s5
  %s8 = scalar_select 0, %s7, %s5
  $region1: #{tpu_custom_call.1} parent=0
    #allocation2 [shape = 'u8[4096]{0}', space=vmem, size = 0x1000, scoped, tag = 'output window, operand 0, single buffered']
    #allocation3 [shape = 's32[1]{0}', space=sflag, size = 0x4, scoped, tag = 'scoped memory for tpu_custom_call.1']
    %9 = vsyncpa [#allocation3], 0
    // Predicated region
    $region2: #{tpu_custom_call.1} parent=1 // pred_check
      _
    $region3: #{tpu_custom_call.1} parent=1 // pred_check_branch
      %11 = sbr.rel (0) target = $region5
    $region4: #{tpu_custom_call.1} parent=1 // pred_region
      _
    $region5: #{tpu_custom_call.1} parent=1 // pred_fallthru
      _
    // Predicated region
    $region6: #{tpu_custom_call.1} parent=1 // pred_check
      _
    $region7: #{tpu_custom_call.1} parent=1 // pred_check_branch
      %13 = sbr.rel (0) target = $region9
    $region8: #{tpu_custom_call.1} parent=1 // pred_region
      _
    $region9: #{tpu_custom_call.1} parent=1 // pred_fallthru
      _
    // Predicated region
    $region10: #{tpu_custom_call.1} parent=1 // pred_check
      _
    $region11: #{tpu_custom_call.1} parent=1 // pred_check_branch
      %15 = sbr.rel (0) target = $region13
    $region12: #{tpu_custom_call.1} parent=1 // pred_region
      _
    $region13: #{tpu_custom_call.1} parent=1 // pred_fallthru
      _
    // Predicated region
    $region14: #{tpu_custom_call.1} parent=1 // pred_check
      _
    $region15: #{tpu_custom_call.1} parent=1 // pred_check_branch
      %17 = sbr.rel (0) target = $region17
    $region16: #{tpu_custom_call.1} parent=1 // pred_region
      _
    $region17: #{tpu_custom_call.1} parent=1 // pred_fallthru
      _
    %v18 = vld [vmem:[%s0] sm:$0xff]
    %v19 = vld [vmem:[%s0 + $0x8] sm:$0xff]
    %v20 = vld [vmem:[%s0 + $0x10] sm:$0xff]
    %v21 = vld [vmem:[%s0 + $0x18] sm:$0xff]
    %v22 = vld [vmem:[%s0 + $0x20] sm:$0xff]
    %v23 = vld [vmem:[%s0 + $0x28] sm:$0xff]
    %v24 = vld [vmem:[%s0 + $0x30] sm:$0xff]
    %v25 = vld [vmem:[%s0 + $0x38] sm:$0xff]
    %v26 = vld [vmem:[%s0 + $0x40] sm:$0xff]
    %v27 = vld [vmem:[%s0 + $0x48] sm:$0xff]
    %v28 = vld [vmem:[%s0 + $0x50] sm:$0xff]
    %v29 = vld [vmem:[%s0 + $0x58] sm:$0xff]
    %v30 = vld [vmem:[%s0 + $0x60] sm:$0xff]
    %v31 = vld [vmem:[%s0 + $0x68] sm:$0xff]
    %v32 = vld [vmem:[%s0 + $0x70] sm:$0xff]
    %v33 = vld [vmem:[%s0 + $0x78] sm:$0xff]
    %v34 = vld [vmem:[%s1] sm:$0xff]
    %v35 = vld [vmem:[%s1 + $0x8] sm:$0xff]
    %v36 = vld [vmem:[%s1 + $0x10] sm:$0xff]
    %v37 = vld [vmem:[%s1 + $0x18] sm:$0xff]
    %v38 = vld [vmem:[%s1 + $0x20] sm:$0xff]
    %v39 = vld [vmem:[%s1 + $0x28] sm:$0xff]
    %v40 = vld [vmem:[%s1 + $0x30] sm:$0xff]
    %v41 = vld [vmem:[%s1 + $0x38] sm:$0xff]
    %v42 = vld [vmem:[%s1 + $0x40] sm:$0xff]
    %v43 = vld [vmem:[%s1 + $0x48] sm:$0xff]
    %v44 = vld [vmem:[%s1 + $0x50] sm:$0xff]
    %v45 = vld [vmem:[%s1 + $0x58] sm:$0xff]
    %v46 = vld [vmem:[%s1 + $0x60] sm:$0xff]
    %v47 = vld [vmem:[%s1 + $0x68] sm:$0xff]
    %v48 = vld [vmem:[%s1 + $0x70] sm:$0xff]
    %v49 = vld [vmem:[%s1 + $0x78] sm:$0xff]
    %v50 = vld [vmem:[%s2] sm:$0xff]
    %v51 = vld [vmem:[%s2 + $0x8] sm:$0xff]
    %v52 = vld [vmem:[%s3] sm:$0xff]
    %v53 = vld [vmem:[%s3 + $0x8] sm:$0xff]
    %v54 = vld [vmem:[%s3 + $0x10] sm:$0xff]
    %v55 = vld [vmem:[%s3 + $0x18] sm:$0xff]
    %v56 = vld [vmem:[%s3 + $0x20] sm:$0xff]
    %v57 = vld [vmem:[%s3 + $0x28] sm:$0xff]
    %v58 = vld [vmem:[%s3 + $0x30] sm:$0xff]
    %v59 = vld [vmem:[%s3 + $0x38] sm:$0xff]
    %v60 = vld [vmem:[%s3 + $0x40] sm:$0xff]
    %v61 = vld [vmem:[%s3 + $0x48] sm:$0xff]
    %v62 = vld [vmem:[%s3 + $0x50] sm:$0xff]
    %v63 = vld [vmem:[%s3 + $0x58] sm:$0xff]
    %v64 = vld [vmem:[%s3 + $0x60] sm:$0xff]
    %v65 = vld [vmem:[%s3 + $0x68] sm:$0xff]
    %v66 = vld [vmem:[%s3 + $0x70] sm:$0xff]
    %v67 = vld [vmem:[%s3 + $0x78] sm:$0xff]
    %vm68 = vcmask 130048
    %v70 = vsel %vm68, %v18, 0
    %v73 = vsel %vm68, %v19, 0
    %v76 = vsel %vm68, %v20, 0
    %v79 = vsel %vm68, %v21, 0
    %v82 = vsel %vm68, %v22, 0
    %v85 = vsel %vm68, %v23, 0
    %v88 = vsel %vm68, %v24, 0
    %v91 = vsel %vm68, %v25, 0
    %v94 = vsel %vm68, %v26, 0
    %v97 = vsel %vm68, %v27, 0
    %v100 = vsel %vm68, %v28, 0
    %v103 = vsel %vm68, %v29, 0
    %v106 = vsel %vm68, %v30, 0
    %v109 = vsel %vm68, %v31, 0
    %v112 = vsel %vm68, %v32, 0
    %v115 = vsel %vm68, %v33, 0
    %117 = vmatprep.subr.mxu0 0.0
    %118 = vmatpush1.msra.mxu0 %v50
    %119 = vmatprep.subr.mxu0 0.0
    %120 = vmatpush1.msra.mxu0 %v51
    %121 = vmatprep.subr.mxu0 0.0
    %122 = vmatpush1.msra.mxu0 0.0
    %123 = vmatprep.subr.mxu0 0.0
    %124 = vmatpush1.msra.mxu0 0.0
    %125 = vmatprep.subr.mxu0 0.0
    %126 = vmatpush1.msra.mxu0 0.0
    %127 = vmatprep.subr.mxu0 0.0
    %128 = vmatpush1.msra.mxu0 0.0
    %129 = vmatprep.subr.mxu0 0.0
    %130 = vmatpush1.msra.mxu0 0.0
    %131 = vmatprep.subr.mxu0 0.0
    %132 = vmatpush1.msra.mxu0 0.0
    %133 = vmatprep.subr.mxu0 0.0
    %134 = vmatpush1.msra.mxu0 0.0
    %135 = vmatprep.subr.mxu0 0.0
    %136 = vmatpush1.msra.mxu0 0.0
    %137 = vmatprep.subr.mxu0 0.0
    %138 = vmatpush1.msra.mxu0 0.0
    %139 = vmatprep.subr.mxu0 0.0
    %140 = vmatpush1.msra.mxu0 0.0
    %141 = vmatprep.subr.mxu0 0.0
    %142 = vmatpush1.msra.mxu0 0.0
    %143 = vmatprep.subr.mxu0 0.0
    %144 = vmatpush1.msra.mxu0 0.0
    %145 = vmatprep.subr.mxu0 0.0
    %146 = vmatpush1.msra.mxu0 0.0
    %147 = vmatprep.subr.mxu0 0.0
    %148 = vmatpush1.msra.mxu0 0.0
    %149 = vmatprep.subr.mxu0 0.0
    %150 = vmatpush1.msra.mxu0 0.0
    %151 = vmatprep.subr.mxu0 0.0
    %152 = vmatpush1.msra.mxu0 0.0
    %153 = vmatprep.subr.mxu0 0.0
    %154 = vmatpush1.msra.mxu0 0.0
    %155 = vmatprep.subr.mxu0 0.0
    %156 = vmatpush1.msra.mxu0 0.0
    %157 = vmatprep.subr.mxu0 0.0
    %158 = vmatpush1.msra.mxu0 0.0
    %159 = vmatprep.subr.mxu0 0.0
    %160 = vmatpush1.msra.mxu0 0.0
    %161 = vmatprep.subr.mxu0 0.0
    %162 = vmatpush1.msra.mxu0 0.0
    %163 = vmatprep.subr.mxu0 0.0
    %164 = vmatpush1.msra.mxu0 0.0
    %165 = vmatprep.subr.mxu0 0.0
    %166 = vmatpush1.msra.mxu0 0.0
    %167 = vmatprep.subr.mxu0 0.0
    %168 = vmatpush1.msra.mxu0 0.0
    %169 = vmatprep.subr.mxu0 0.0
    %170 = vmatpush1.msra.mxu0 0.0
    %171 = vmatprep.subr.mxu0 0.0
    %172 = vmatpush1.msra.mxu0 0.0
    %173 = vmatprep.subr.mxu0 0.0
    %174 = vmatpush1.msra.mxu0 0.0
    %175 = vmatprep.subr.mxu0 0.0
    %176 = vmatpush1.msra.mxu0 0.0
    %177 = vmatprep.subr.mxu0 0.0
    %178 = vmatpush1.msra.mxu0 0.0
    %179 = vmatprep.subr.mxu0 0.0
    %180 = vmatpush1.msra.mxu0 0.0
    %181 = vmatprep.mubr.f32.mxu0 0.0
    %182 = vmatmul.mubr.f32.gmra.mrb[0].mxu0 %v70
    %v183 = vpop.f32.mrb[0].mxu0
    %v184 = vadd.f32 0.0, %v183
    %v185 = vpop.f32.mrb[0].mxu0
    %186 = vmatprep.mubr.f32.mxu0 0.0
    %187 = vmatmul.mubr.f32.gmra.mrb[0].mxu0 %v73
    %v188 = vpop.f32.mrb[0].mxu0
    %v189 = vadd.f32 0.0, %v188
    %v190 = vpop.f32.mrb[0].mxu0
    %191 = vmatprep.mubr.f32.mxu0 0.0
    %192 = vmatmul.mubr.f32.gmra.mrb[0].mxu0 %v76
    %v193 = vpop.f32.mrb[0].mxu0
    %v194 = vadd.f32 0.0, %v193
    %v195 = vpop.f32.mrb[0].mxu0
    %196 = vmatprep.mubr.f32.mxu0 0.0
    %197 = vmatmul.mubr.f32.gmra.mrb[0].mxu0 %v79
    %v198 = vpop.f32.mrb[0].mxu0
    %v199 = vadd.f32 0.0, %v198
    %v200 = vpop.f32.mrb[0].mxu0
    %201 = vmatprep.mubr.f32.mxu0 0.0
    %202 = vmatmul.mubr.f32.gmra.mrb[0].mxu0 %v82
    %v203 = vpop.f32.mrb[0].mxu0
    %v204 = vadd.f32 0.0, %v203
    %v205 = vpop.f32.mrb[0].mxu0
    %206 = vmatprep.mubr.f32.mxu0 0.0
    %207 = vmatmul.mubr.f32.gmra.mrb[0].mxu0 %v85
    %v208 = vpop.f32.mrb[0].mxu0
    %v209 = vadd.f32 0.0, %v208
    %v210 = vpop.f32.mrb[0].mxu0
    %211 = vmatprep.mubr.f32.mxu0 0.0
    %212 = vmatmul.mubr.f32.gmra.mrb[0].mxu0 %v88
    %v213 = vpop.f32.mrb[0].mxu0
    %v214 = vadd.f32 0.0, %v213
    %v215 = vpop.f32.mrb[0].mxu0
    %216 = vmatprep.mubr.f32.mxu0 0.0
    %217 = vmatmul.mubr.f32.gmra.mrb[0].mxu0 %v91
    %v218 = vpop.f32.mrb[0].mxu0
    %v219 = vadd.f32 0.0, %v218
    %v220 = vpop.f32.mrb[0].mxu0
    %221 = vmatprep.mubr.f32.mxu0 0.0
    %222 = vmatmul.mubr.f32.gmra.mrb[0].mxu0 %v94
    %v223 = vpop.f32.mrb[0].mxu0
    %v224 = vadd.f32 0.0, %v223
    %v225 = vpop.f32.mrb[0].mxu0
    %226 = vmatprep.mubr.f32.mxu0 0.0
    %227 = vmatmul.mubr.f32.gmra.mrb[0].mxu0 %v97
    %v228 = vpop.f32.mrb[0].mxu0
    %v229 = vadd.f32 0.0, %v228
    %v230 = vpop.f32.mrb[0].mxu0
    %231 = vmatprep.mubr.f32.mxu0 0.0
    %232 = vmatmul.mubr.f32.gmra.mrb[0].mxu0 %v100
    %v233 = vpop.f32.mrb[0].mxu0
    %v234 = vadd.f32 0.0, %v233
    %v235 = vpop.f32.mrb[0].mxu0
    %236 = vmatprep.mubr.f32.mxu0 0.0
    %237 = vmatmul.mubr.f32.gmra.mrb[0].mxu0 %v103
    %v238 = vpop.f32.mrb[0].mxu0
    %v239 = vadd.f32 0.0, %v238
    %v240 = vpop.f32.mrb[0].mxu0
    %241 = vmatprep.mubr.f32.mxu0 0.0
    %242 = vmatmul.mubr.f32.gmra.mrb[0].mxu0 %v106
    %v243 = vpop.f32.mrb[0].mxu0
    %v244 = vadd.f32 0.0, %v243
    %v245 = vpop.f32.mrb[0].mxu0
    %246 = vmatprep.mubr.f32.mxu0 0.0
    %247 = vmatmul.mubr.f32.gmra.mrb[0].mxu0 %v109
    %v248 = vpop.f32.mrb[0].mxu0
    %v249 = vadd.f32 0.0, %v248
    %v250 = vpop.f32.mrb[0].mxu0
    %251 = vmatprep.mubr.f32.mxu0 0.0
    %252 = vmatmul.mubr.f32.gmra.mrb[0].mxu0 %v112
    %v253 = vpop.f32.mrb[0].mxu0
    %v254 = vadd.f32 0.0, %v253
    %v255 = vpop.f32.mrb[0].mxu0
    %256 = vmatprep.mubr.f32.mxu0 0.0
    %257 = vmatmul.mubr.f32.gmra.mrb[0].mxu0 %v115
    %v258 = vpop.f32.mrb[0].mxu0
    %v259 = vadd.f32 0.0, %v258
    %v260 = vpop.f32.mrb[0].mxu0
    %261 = vdwg.mxu0
    %262 = vmatprep.subr.mxu0 0.0
    %263 = vmatpush1.msra.mxu0 %v184
    %264 = vmatprep.subr.mxu0 0.0
    %265 = vmatpush1.msra.mxu0 %v189
    %266 = vmatprep.subr.mxu0 0.0
    %267 = vmatpush1.msra.mxu0 %v194
    %268 = vmatprep.subr.mxu0 0.0
    %269 = vmatpush1.msra.mxu0 %v199
    %270 = vmatprep.subr.mxu0 0.0
    %271 = vmatpush1.msra.mxu0 %v204
    %272 = vmatprep.subr.mxu0 0.0
    %273 = vmatpush1.msra.mxu0 %v209
    %274 = vmatprep.subr.mxu0 0.0
    %275 = vmatpush1.msra.mxu0 %v214
    %276 = vmatprep.subr.mxu0 0.0
    %277 = vmatpush1.msra.mxu0 %v219
    %278 = vmatprep.subr.mxu0 0.0
    %279 = vmatpush1.msra.mxu0 %v224
    %280 = vmatprep.subr.mxu0 0.0
    %281 = vmatpush1.msra.mxu0 %v229
    %282 = vmatprep.subr.mxu0 0.0
    %283 = vmatpush1.msra.mxu0 %v234
    %284 = vmatprep.subr.mxu0 0.0
    %285 = vmatpush1.msra.mxu0 %v239
    %286 = vmatprep.subr.mxu0 0.0
    %287 = vmatpush1.msra.mxu0 %v244
    %288 = vmatprep.subr.mxu0 0.0
    %289 = vmatpush1.msra.mxu0 %v249
    %290 = vmatprep.subr.mxu0 0.0
    %291 = vmatpush1.msra.mxu0 %v254
    %292 = vmatprep.subr.mxu0 0.0
    %293 = vmatpush1.msra.mxu0 %v259
    %294 = vmatprep.subr.mxu0 0.0
    %295 = vmatpush1.msra.mxu0 0.0
    %296 = vmatprep.subr.mxu0 0.0
    %297 = vmatpush1.msra.mxu0 0.0
    %298 = vmatprep.subr.mxu0 0.0
    %299 = vmatpush1.msra.mxu0 0.0
    %300 = vmatprep.subr.mxu0 0.0
    %301 = vmatpush1.msra.mxu0 0.0
    %302 = vmatprep.subr.mxu0 0.0
    %303 = vmatpush1.msra.mxu0 0.0
    %304 = vmatprep.subr.mxu0 0.0
    %305 = vmatpush1.msra.mxu0 0.0
    %306 = vmatprep.subr.mxu0 0.0
    %307 = vmatpush1.msra.mxu0 0.0
    %308 = vmatprep.subr.mxu0 0.0
    %309 = vmatpush1.msra.mxu0 0.0
    %310 = vmatprep.subr.mxu0 0.0
    %311 = vmatpush1.msra.mxu0 0.0
    %312 = vmatprep.subr.mxu0 0.0
    %313 = vmatpush1.msra.mxu0 0.0
    %314 = vmatprep.subr.mxu0 0.0
    %315 = vmatpush1.msra.mxu0 0.0
    %316 = vmatprep.subr.mxu0 0.0
    %317 = vmatpush1.msra.mxu0 0.0
    %318 = vmatprep.subr.mxu0 0.0
    %319 = vmatpush1.msra.mxu0 0.0
    %320 = vmatprep.subr.mxu0 0.0
    %321 = vmatpush1.msra.mxu0 0.0
    %322 = vmatprep.subr.mxu0 0.0
    %323 = vmatpush1.msra.mxu0 0.0
    %324 = vmatprep.subr.mxu0 0.0
    %325 = vmatpush1.msra.mxu0 0.0
    %326 = vmatprep.mubr.f32.mxu0 0.0
    %327 = vmatmul.mubr.f32.gmra.mrb[0].mxu0 %v52
    %v328 = vpop.f32.mrb[0].mxu0
    %v329 = vadd.f32 0.0, %v328
    %v330 = vpop.f32.mrb[0].mxu0
    %331 = vmatprep.mubr.f32.mxu0 0.0
    %332 = vmatmul.mubr.f32.gmra.mrb[0].mxu0 %v53
    %v333 = vpop.f32.mrb[0].mxu0
    %v334 = vadd.f32 0.0, %v333
    %v335 = vpop.f32.mrb[0].mxu0
    %336 = vmatprep.mubr.f32.mxu0 0.0
    %337 = vmatmul.mubr.f32.gmra.mrb[0].mxu0 %v54
    %v338 = vpop.f32.mrb[0].mxu0
    %v339 = vadd.f32 0.0, %v338
    %v340 = vpop.f32.mrb[0].mxu0
    %341 = vmatprep.mubr.f32.mxu0 0.0
    %342 = vmatmul.mubr.f32.gmra.mrb[0].mxu0 %v55
    %v343 = vpop.f32.mrb[0].mxu0
    %v344 = vadd.f32 0.0, %v343
    %v345 = vpop.f32.mrb[0].mxu0
    %346 = vmatprep.mubr.f32.mxu0 0.0
    %347 = vmatmul.mubr.f32.gmra.mrb[0].mxu0 %v56
    %v348 = vpop.f32.mrb[0].mxu0
    %v349 = vadd.f32 0.0, %v348
    %v350 = vpop.f32.mrb[0].mxu0
    %351 = vmatprep.mubr.f32.mxu0 0.0
    %352 = vmatmul.mubr.f32.gmra.mrb[0].mxu0 %v57
    %v353 = vpop.f32.mrb[0].mxu0
    %v354 = vadd.f32 0.0, %v353
    %v355 = vpop.f32.mrb[0].mxu0
    %356 = vmatprep.mubr.f32.mxu0 0.0
    %357 = vmatmul.mubr.f32.gmra.mrb[0].mxu0 %v58
    %v358 = vpop.f32.mrb[0].mxu0
    %v359 = vadd.f32 0.0, %v358
    %v360 = vpop.f32.mrb[0].mxu0
    %361 = vmatprep.mubr.f32.mxu0 0.0
    %362 = vmatmul.mubr.f32.gmra.mrb[0].mxu0 %v59
    %v363 = vpop.f32.mrb[0].mxu0
    %v364 = vadd.f32 0.0, %v363
    %v365 = vpop.f32.mrb[0].mxu0
    %366 = vmatprep.mubr.f32.mxu0 0.0
    %367 = vmatmul.mubr.f32.gmra.mrb[0].mxu0 %v60
    %v368 = vpop.f32.mrb[0].mxu0
    %v369 = vadd.f32 0.0, %v368
    %v370 = vpop.f32.mrb[0].mxu0
    %371 = vmatprep.mubr.f32.mxu0 0.0
    %372 = vmatmul.mubr.f32.gmra.mrb[0].mxu0 %v61
    %v373 = vpop.f32.mrb[0].mxu0
    %v374 = vadd.f32 0.0, %v373
    %v375 = vpop.f32.mrb[0].mxu0
    %376 = vmatprep.mubr.f32.mxu0 0.0
    %377 = vmatmul.mubr.f32.gmra.mrb[0].mxu0 %v62
    %v378 = vpop.f32.mrb[0].mxu0
    %v379 = vadd.f32 0.0, %v378
    %v380 = vpop.f32.mrb[0].mxu0
    %381 = vmatprep.mubr.f32.mxu0 0.0
    %382 = vmatmul.mubr.f32.gmra.mrb[0].mxu0 %v63
    %v383 = vpop.f32.mrb[0].mxu0
    %v384 = vadd.f32 0.0, %v383
    %v385 = vpop.f32.mrb[0].mxu0
    %386 = vmatprep.mubr.f32.mxu0 0.0
    %387 = vmatmul.mubr.f32.gmra.mrb[0].mxu0 %v64
    %v388 = vpop.f32.mrb[0].mxu0
    %v389 = vadd.f32 0.0, %v388
    %v390 = vpop.f32.mrb[0].mxu0
    %391 = vmatprep.mubr.f32.mxu0 0.0
    %392 = vmatmul.mubr.f32.gmra.mrb[0].mxu0 %v65
    %v393 = vpop.f32.mrb[0].mxu0
    %v394 = vadd.f32 0.0, %v393
    %v395 = vpop.f32.mrb[0].mxu0
    %396 = vmatprep.mubr.f32.mxu0 0.0
    %397 = vmatmul.mubr.f32.gmra.mrb[0].mxu0 %v66
    %v398 = vpop.f32.mrb[0].mxu0
    %v399 = vadd.f32 0.0, %v398
    %v400 = vpop.f32.mrb[0].mxu0
    %401 = vmatprep.mubr.f32.mxu0 0.0
    %402 = vmatmul.mubr.f32.gmra.mrb[0].mxu0 %v67
    %v403 = vpop.f32.mrb[0].mxu0
    %v404 = vadd.f32 0.0, %v403
    %v405 = vpop.f32.mrb[0].mxu0
    %406 = vdwg.mxu0
    %v408 = vsel %vm68, %v34, 0
    %v411 = vsel %vm68, %v35, 0
    %v414 = vsel %vm68, %v36, 0
    %v417 = vsel %vm68, %v37, 0
    %v420 = vsel %vm68, %v38, 0
    %v423 = vsel %vm68, %v39, 0
    %v426 = vsel %vm68, %v40, 0
    %v429 = vsel %vm68, %v41, 0
    %v432 = vsel %vm68, %v42, 0
    %v435 = vsel %vm68, %v43, 0
    %v438 = vsel %vm68, %v44, 0
    %v441 = vsel %vm68, %v45, 0
    %v444 = vsel %vm68, %v46, 0
    %v447 = vsel %vm68, %v47, 0
    %v450 = vsel %vm68, %v48, 0
    %v453 = vsel %vm68, %v49, 0
    %455 = vmatprep.subr.mxu0 0.0
    %456 = vmatpush1.msra.mxu0 %v50
    %457 = vmatprep.subr.mxu0 0.0
    %458 = vmatpush1.msra.mxu0 %v51
    %459 = vmatprep.subr.mxu0 0.0
    %460 = vmatpush1.msra.mxu0 0.0
    %461 = vmatprep.subr.mxu0 0.0
    %462 = vmatpush1.msra.mxu0 0.0
    %463 = vmatprep.subr.mxu0 0.0
    %464 = vmatpush1.msra.mxu0 0.0
    %465 = vmatprep.subr.mxu0 0.0
    %466 = vmatpush1.msra.mxu0 0.0
    %467 = vmatprep.subr.mxu0 0.0
    %468 = vmatpush1.msra.mxu0 0.0
    %469 = vmatprep.subr.mxu0 0.0
    %470 = vmatpush1.msra.mxu0 0.0
    %471 = vmatprep.subr.mxu0 0.0
    %472 = vmatpush1.msra.mxu0 0.0
    %473 = vmatprep.subr.mxu0 0.0
    %474 = vmatpush1.msra.mxu0 0.0
    %475 = vmatprep.subr.mxu0 0.0
    %476 = vmatpush1.msra.mxu0 0.0
    %477 = vmatprep.subr.mxu0 0.0
    %478 = vmatpush1.msra.mxu0 0.0
    %479 = vmatprep.subr.mxu0 0.0
    %480 = vmatpush1.msra.mxu0 0.0
    %481 = vmatprep.subr.mxu0 0.0
    %482 = vmatpush1.msra.mxu0 0.0
    %483 = vmatprep.subr.mxu0 0.0
    %484 = vmatpush1.msra.mxu0 0.0
    %485 = vmatprep.subr.mxu0 0.0
    %486 = vmatpush1.msra.mxu0 0.0
    %487 = vmatprep.subr.mxu0 0.0
    %488 = vmatpush1.msra.mxu0 0.0
    %489 = vmatprep.subr.mxu0 0.0
    %490 = vmatpush1.msra.mxu0 0.0
    %491 = vmatprep.subr.mxu0 0.0
    %492 = vmatpush1.msra.mxu0 0.0
    %493 = vmatprep.subr.mxu0 0.0
    %494 = vmatpush1.msra.mxu0 0.0
    %495 = vmatprep.subr.mxu0 0.0
    %496 = vmatpush1.msra.mxu0 0.0
    %497 = vmatprep.subr.mxu0 0.0
    %498 = vmatpush1.msra.mxu0 0.0
    %499 = vmatprep.subr.mxu0 0.0
    %500 = vmatpush1.msra.mxu0 0.0
    %501 = vmatprep.subr.mxu0 0.0
    %502 = vmatpush1.msra.mxu0 0.0
    %503 = vmatprep.subr.mxu0 0.0
    %504 = vmatpush1.msra.mxu0 0.0
    %505 = vmatprep.subr.mxu0 0.0
    %506 = vmatpush1.msra.mxu0 0.0
    %507 = vmatprep.subr.mxu0 0.0
    %508 = vmatpush1.msra.mxu0 0.0
    %509 = vmatprep.subr.mxu0 0.0
    %510 = vmatpush1.msra.mxu0 0.0
    %511 = vmatprep.subr.mxu0 0.0
    %512 = vmatpush1.msra.mxu0 0.0
    %513 = vmatprep.subr.mxu0 0.0
    %514 = vmatpush1.msra.mxu0 0.0
    %515 = vmatprep.subr.mxu0 0.0
    %516 = vmatpush1.msra.mxu0 0.0
    %517 = vmatprep.subr.mxu0 0.0
    %518 = vmatpush1.msra.mxu0 0.0
    %519 = vmatprep.mubr.f32.mxu0 0.0
    %520 = vmatmul.mubr.f32.gmra.mrb[0].mxu0 %v408
    %v521 = vpop.f32.mrb[0].mxu0
    %v522 = vadd.f32 0.0, %v521
    %v523 = vpop.f32.mrb[0].mxu0
    %524 = vmatprep.mubr.f32.mxu0 0.0
    %525 = vmatmul.mubr.f32.gmra.mrb[0].mxu0 %v411
    %v526 = vpop.f32.mrb[0].mxu0
    %v527 = vadd.f32 0.0, %v526
    %v528 = vpop.f32.mrb[0].mxu0
    %529 = vmatprep.mubr.f32.mxu0 0.0
    %530 = vmatmul.mubr.f32.gmra.mrb[0].mxu0 %v414
    %v531 = vpop.f32.mrb[0].mxu0
    %v532 = vadd.f32 0.0, %v531
    %v533 = vpop.f32.mrb[0].mxu0
    %534 = vmatprep.mubr.f32.mxu0 0.0
    %535 = vmatmul.mubr.f32.gmra.mrb[0].mxu0 %v417
    %v536 = vpop.f32.mrb[0].mxu0
    %v537 = vadd.f32 0.0, %v536
    %v538 = vpop.f32.mrb[0].mxu0
    %539 = vmatprep.mubr.f32.mxu0 0.0
    %540 = vmatmul.mubr.f32.gmra.mrb[0].mxu0 %v420
    %v541 = vpop.f32.mrb[0].mxu0
    %v542 = vadd.f32 0.0, %v541
    %v543 = vpop.f32.mrb[0].mxu0
    %544 = vmatprep.mubr.f32.mxu0 0.0
    %545 = vmatmul.mubr.f32.gmra.mrb[0].mxu0 %v423
    %v546 = vpop.f32.mrb[0].mxu0
    %v547 = vadd.f32 0.0, %v546
    %v548 = vpop.f32.mrb[0].mxu0
    %549 = vmatprep.mubr.f32.mxu0 0.0
    %550 = vmatmul.mubr.f32.gmra.mrb[0].mxu0 %v426
    %v551 = vpop.f32.mrb[0].mxu0
    %v552 = vadd.f32 0.0, %v551
    %v553 = vpop.f32.mrb[0].mxu0
    %554 = vmatprep.mubr.f32.mxu0 0.0
    %555 = vmatmul.mubr.f32.gmra.mrb[0].mxu0 %v429
    %v556 = vpop.f32.mrb[0].mxu0
    %v557 = vadd.f32 0.0, %v556
    %v558 = vpop.f32.mrb[0].mxu0
    %559 = vmatprep.mubr.f32.mxu0 0.0
    %560 = vmatmul.mubr.f32.gmra.mrb[0].mxu0 %v432
    %v561 = vpop.f32.mrb[0].mxu0
    %v562 = vadd.f32 0.0, %v561
    %v563 = vpop.f32.mrb[0].mxu0
    %564 = vmatprep.mubr.f32.mxu0 0.0
    %565 = vmatmul.mubr.f32.gmra.mrb[0].mxu0 %v435
    %v566 = vpop.f32.mrb[0].mxu0
    %v567 = vadd.f32 0.0, %v566
    %v568 = vpop.f32.mrb[0].mxu0
    %569 = vmatprep.mubr.f32.mxu0 0.0
    %570 = vmatmul.mubr.f32.gmra.mrb[0].mxu0 %v438
    %v571 = vpop.f32.mrb[0].mxu0
    %v572 = vadd.f32 0.0, %v571
    %v573 = vpop.f32.mrb[0].mxu0
    %574 = vmatprep.mubr.f32.mxu0 0.0
    %575 = vmatmul.mubr.f32.gmra.mrb[0].mxu0 %v441
    %v576 = vpop.f32.mrb[0].mxu0
    %v577 = vadd.f32 0.0, %v576
    %v578 = vpop.f32.mrb[0].mxu0
    %579 = vmatprep.mubr.f32.mxu0 0.0
    %580 = vmatmul.mubr.f32.gmra.mrb[0].mxu0 %v444
    %v581 = vpop.f32.mrb[0].mxu0
    %v582 = vadd.f32 0.0, %v581
    %v583 = vpop.f32.mrb[0].mxu0
    %584 = vmatprep.mubr.f32.mxu0 0.0
    %585 = vmatmul.mubr.f32.gmra.mrb[0].mxu0 %v447
    %v586 = vpop.f32.mrb[0].mxu0
    %v587 = vadd.f32 0.0, %v586
    %v588 = vpop.f32.mrb[0].mxu0
    %589 = vmatprep.mubr.f32.mxu0 0.0
    %590 = vmatmul.mubr.f32.gmra.mrb[0].mxu0 %v450
    %v591 = vpop.f32.mrb[0].mxu0
    %v592 = vadd.f32 0.0, %v591
    %v593 = vpop.f32.mrb[0].mxu0
    %594 = vmatprep.mubr.f32.mxu0 0.0
    %595 = vmatmul.mubr.f32.gmra.mrb[0].mxu0 %v453
    %v596 = vpop.f32.mrb[0].mxu0
    %v597 = vadd.f32 0.0, %v596
    %v598 = vpop.f32.mrb[0].mxu0
    %599 = vdwg.mxu0
    %600 = vmatprep.subr.mxu0 0.0
    %601 = vmatpush1.msra.mxu0 %v522
    %602 = vmatprep.subr.mxu0 0.0
    %603 = vmatpush1.msra.mxu0 %v527
    %604 = vmatprep.subr.mxu0 0.0
    %605 = vmatpush1.msra.mxu0 %v532
    %606 = vmatprep.subr.mxu0 0.0
    %607 = vmatpush1.msra.mxu0 %v537
    %608 = vmatprep.subr.mxu0 0.0
    %609 = vmatpush1.msra.mxu0 %v542
    %610 = vmatprep.subr.mxu0 0.0
    %611 = vmatpush1.msra.mxu0 %v547
    %612 = vmatprep.subr.mxu0 0.0
    %613 = vmatpush1.msra.mxu0 %v552
    %614 = vmatprep.subr.mxu0 0.0
    %615 = vmatpush1.msra.mxu0 %v557
    %616 = vmatprep.subr.mxu0 0.0
    %617 = vmatpush1.msra.mxu0 %v562
    %618 = vmatprep.subr.mxu0 0.0
    %619 = vmatpush1.msra.mxu0 %v567
    %620 = vmatprep.subr.mxu0 0.0
    %621 = vmatpush1.msra.mxu0 %v572
    %622 = vmatprep.subr.mxu0 0.0
    %623 = vmatpush1.msra.mxu0 %v577
    %624 = vmatprep.subr.mxu0 0.0
    %625 = vmatpush1.msra.mxu0 %v582
    %626 = vmatprep.subr.mxu0 0.0
    %627 = vmatpush1.msra.mxu0 %v587
    %628 = vmatprep.subr.mxu0 0.0
    %629 = vmatpush1.msra.mxu0 %v592
    %630 = vmatprep.subr.mxu0 0.0
    %631 = vmatpush1.msra.mxu0 %v597
    %632 = vmatprep.subr.mxu0 0.0
    %633 = vmatpush1.msra.mxu0 0.0
    %634 = vmatprep.subr.mxu0 0.0
    %635 = vmatpush1.msra.mxu0 0.0
    %636 = vmatprep.subr.mxu0 0.0
    %637 = vmatpush1.msra.mxu0 0.0
    %638 = vmatprep.subr.mxu0 0.0
    %639 = vmatpush1.msra.mxu0 0.0
    %640 = vmatprep.subr.mxu0 0.0
    %641 = vmatpush1.msra.mxu0 0.0
    %642 = vmatprep.subr.mxu0 0.0
    %643 = vmatpush1.msra.mxu0 0.0
    %644 = vmatprep.subr.mxu0 0.0
    %645 = vmatpush1.msra.mxu0 0.0
    %646 = vmatprep.subr.mxu0 0.0
    %647 = vmatpush1.msra.mxu0 0.0
    %648 = vmatprep.subr.mxu0 0.0
    %649 = vmatpush1.msra.mxu0 0.0
    %650 = vmatprep.subr.mxu0 0.0
    %651 = vmatpush1.msra.mxu0 0.0
    %652 = vmatprep.subr.mxu0 0.0
    %653 = vmatpush1.msra.mxu0 0.0
    %654 = vmatprep.subr.mxu0 0.0
    %655 = vmatpush1.msra.mxu0 0.0
    %656 = vmatprep.subr.mxu0 0.0
    %657 = vmatpush1.msra.mxu0 0.0
    %658 = vmatprep.subr.mxu0 0.0
    %659 = vmatpush1.msra.mxu0 0.0
    %660 = vmatprep.subr.mxu0 0.0
    %661 = vmatpush1.msra.mxu0 0.0
    %662 = vmatprep.subr.mxu0 0.0
    %663 = vmatpush1.msra.mxu0 0.0
    %664 = vmatprep.mubr.f32.mxu0 0.0
    %665 = vmatmul.mubr.f32.gmra.mrb[0].mxu0 %v52
    %v666 = vpop.f32.mrb[0].mxu0
    %v667 = vadd.f32 0.0, %v666
    %v668 = vpop.f32.mrb[0].mxu0
    %669 = vmatprep.mubr.f32.mxu0 0.0
    %670 = vmatmul.mubr.f32.gmra.mrb[0].mxu0 %v53
    %v671 = vpop.f32.mrb[0].mxu0
    %v672 = vadd.f32 0.0, %v671
    %v673 = vpop.f32.mrb[0].mxu0
    %674 = vmatprep.mubr.f32.mxu0 0.0
    %675 = vmatmul.mubr.f32.gmra.mrb[0].mxu0 %v54
    %v676 = vpop.f32.mrb[0].mxu0
    %v677 = vadd.f32 0.0, %v676
    %v678 = vpop.f32.mrb[0].mxu0
    %679 = vmatprep.mubr.f32.mxu0 0.0
    %680 = vmatmul.mubr.f32.gmra.mrb[0].mxu0 %v55
    %v681 = vpop.f32.mrb[0].mxu0
    %v682 = vadd.f32 0.0, %v681
    %v683 = vpop.f32.mrb[0].mxu0
    %684 = vmatprep.mubr.f32.mxu0 0.0
    %685 = vmatmul.mubr.f32.gmra.mrb[0].mxu0 %v56
    %v686 = vpop.f32.mrb[0].mxu0
    %v687 = vadd.f32 0.0, %v686
    %v688 = vpop.f32.mrb[0].mxu0
    %689 = vmatprep.mubr.f32.mxu0 0.0
    %690 = vmatmul.mubr.f32.gmra.mrb[0].mxu0 %v57
    %v691 = vpop.f32.mrb[0].mxu0
    %v692 = vadd.f32 0.0, %v691
    %v693 = vpop.f32.mrb[0].mxu0
    %694 = vmatprep.mubr.f32.mxu0 0.0
    %695 = vmatmul.mubr.f32.gmra.mrb[0].mxu0 %v58
    %v696 = vpop.f32.mrb[0].mxu0
    %v697 = vadd.f32 0.0, %v696
    %v698 = vpop.f32.mrb[0].mxu0
    %699 = vmatprep.mubr.f32.mxu0 0.0
    %700 = vmatmul.mubr.f32.gmra.mrb[0].mxu0 %v59
    %v701 = vpop.f32.mrb[0].mxu0
    %v702 = vadd.f32 0.0, %v701
    %v703 = vpop.f32.mrb[0].mxu0
    %704 = vmatprep.mubr.f32.mxu0 0.0
    %705 = vmatmul.mubr.f32.gmra.mrb[0].mxu0 %v60
    %v706 = vpop.f32.mrb[0].mxu0
    %v707 = vadd.f32 0.0, %v706
    %v708 = vpop.f32.mrb[0].mxu0
    %709 = vmatprep.mubr.f32.mxu0 0.0
    %710 = vmatmul.mubr.f32.gmra.mrb[0].mxu0 %v61
    %v711 = vpop.f32.mrb[0].mxu0
    %v712 = vadd.f32 0.0, %v711
    %v713 = vpop.f32.mrb[0].mxu0
    %714 = vmatprep.mubr.f32.mxu0 0.0
    %715 = vmatmul.mubr.f32.gmra.mrb[0].mxu0 %v62
    %v716 = vpop.f32.mrb[0].mxu0
    %v717 = vadd.f32 0.0, %v716
    %v718 = vpop.f32.mrb[0].mxu0
    %719 = vmatprep.mubr.f32.mxu0 0.0
    %720 = vmatmul.mubr.f32.gmra.mrb[0].mxu0 %v63
    %v721 = vpop.f32.mrb[0].mxu0
    %v722 = vadd.f32 0.0, %v721
    %v723 = vpop.f32.mrb[0].mxu0
    %724 = vmatprep.mubr.f32.mxu0 0.0
    %725 = vmatmul.mubr.f32.gmra.mrb[0].mxu0 %v64
    %v726 = vpop.f32.mrb[0].mxu0
    %v727 = vadd.f32 0.0, %v726
    %v728 = vpop.f32.mrb[0].mxu0
    %729 = vmatprep.mubr.f32.mxu0 0.0
    %730 = vmatmul.mubr.f32.gmra.mrb[0].mxu0 %v65
    %v731 = vpop.f32.mrb[0].mxu0
    %v732 = vadd.f32 0.0, %v731
    %v733 = vpop.f32.mrb[0].mxu0
    %734 = vmatprep.mubr.f32.mxu0 0.0
    %735 = vmatmul.mubr.f32.gmra.mrb[0].mxu0 %v66
    %v736 = vpop.f32.mrb[0].mxu0
    %v737 = vadd.f32 0.0, %v736
    %v738 = vpop.f32.mrb[0].mxu0
    %739 = vmatprep.mubr.f32.mxu0 0.0
    %740 = vmatmul.mubr.f32.gmra.mrb[0].mxu0 %v67
    %v741 = vpop.f32.mrb[0].mxu0
    %v742 = vadd.f32 0.0, %v741
    %v743 = vpop.f32.mrb[0].mxu0
    %744 = vdwg.mxu0
    %v745 = vmul.f32 %v18, %v18
    %v746 = vmul.f32 %v19, %v19
    %v747 = vmul.f32 %v20, %v20
    %v748 = vmul.f32 %v21, %v21
    %v749 = vmul.f32 %v22, %v22
    %v750 = vmul.f32 %v23, %v23
    %v751 = vmul.f32 %v24, %v24
    %v752 = vmul.f32 %v25, %v25
    %v753 = vmul.f32 %v26, %v26
    %v754 = vmul.f32 %v27, %v27
    %v755 = vmul.f32 %v28, %v28
    %v756 = vmul.f32 %v29, %v29
    %v757 = vmul.f32 %v30, %v30
    %v758 = vmul.f32 %v31, %v31
    %v759 = vmul.f32 %v32, %v32
    %v760 = vmul.f32 %v33, %v33
    %v762 = vsel %vm68, %v745, 0
    %v765 = vsel %vm68, %v746, 0
    %v768 = vsel %vm68, %v747, 0
    %v771 = vsel %vm68, %v748, 0
    %v774 = vsel %vm68, %v749, 0
    %v777 = vsel %vm68, %v750, 0
    %v780 = vsel %vm68, %v751, 0
    %v783 = vsel %vm68, %v752, 0
    %v786 = vsel %vm68, %v753, 0
    %v789 = vsel %vm68, %v754, 0
    %v792 = vsel %vm68, %v755, 0
    %v795 = vsel %vm68, %v756, 0
    %v798 = vsel %vm68, %v757, 0
    %v801 = vsel %vm68, %v758, 0
    %v804 = vsel %vm68, %v759, 0
    %v807 = vsel %vm68, %v760, 0
    %809 = vmatprep.subr.mxu0 0.0
    %810 = vmatpush1.msra.mxu0 %v50
    %811 = vmatprep.subr.mxu0 0.0
    %812 = vmatpush1.msra.mxu0 %v51
    %813 = vmatprep.subr.mxu0 0.0
    %814 = vmatpush1.msra.mxu0 0.0
    %815 = vmatprep.subr.mxu0 0.0
    %816 = vmatpush1.msra.mxu0 0.0
    %817 = vmatprep.subr.mxu0 0.0
    %818 = vmatpush1.msra.mxu0 0.0
    %819 = vmatprep.subr.mxu0 0.0
    %820 = vmatpush1.msra.mxu0 0.0
    %821 = vmatprep.subr.mxu0 0.0
    %822 = vmatpush1.msra.mxu0 0.0
    %823 = vmatprep.subr.mxu0 0.0
    %824 = vmatpush1.msra.mxu0 0.0
    %825 = vmatprep.subr.mxu0 0.0
    %826 = vmatpush1.msra.mxu0 0.0
    %827 = vmatprep.subr.mxu0 0.0
    %828 = vmatpush1.msra.mxu0 0.0
    %829 = vmatprep.subr.mxu0 0.0
    %830 = vmatpush1.msra.mxu0 0.0
    %831 = vmatprep.subr.mxu0 0.0
    %832 = vmatpush1.msra.mxu0 0.0
    %833 = vmatprep.subr.mxu0 0.0
    %834 = vmatpush1.msra.mxu0 0.0
    %835 = vmatprep.subr.mxu0 0.0
    %836 = vmatpush1.msra.mxu0 0.0
    %837 = vmatprep.subr.mxu0 0.0
    %838 = vmatpush1.msra.mxu0 0.0
    %839 = vmatprep.subr.mxu0 0.0
    %840 = vmatpush1.msra.mxu0 0.0
    %841 = vmatprep.subr.mxu0 0.0
    %842 = vmatpush1.msra.mxu0 0.0
    %843 = vmatprep.subr.mxu0 0.0
    %844 = vmatpush1.msra.mxu0 0.0
    %845 = vmatprep.subr.mxu0 0.0
    %846 = vmatpush1.msra.mxu0 0.0
    %847 = vmatprep.subr.mxu0 0.0
    %848 = vmatpush1.msra.mxu0 0.0
    %849 = vmatprep.subr.mxu0 0.0
    %850 = vmatpush1.msra.mxu0 0.0
    %851 = vmatprep.subr.mxu0 0.0
    %852 = vmatpush1.msra.mxu0 0.0
    %853 = vmatprep.subr.mxu0 0.0
    %854 = vmatpush1.msra.mxu0 0.0
    %855 = vmatprep.subr.mxu0 0.0
    %856 = vmatpush1.msra.mxu0 0.0
    %857 = vmatprep.subr.mxu0 0.0
    %858 = vmatpush1.msra.mxu0 0.0
    %859 = vmatprep.subr.mxu0 0.0
    %860 = vmatpush1.msra.mxu0 0.0
    %861 = vmatprep.subr.mxu0 0.0
    %862 = vmatpush1.msra.mxu0 0.0
    %863 = vmatprep.subr.mxu0 0.0
    %864 = vmatpush1.msra.mxu0 0.0
    %865 = vmatprep.subr.mxu0 0.0
    %866 = vmatpush1.msra.mxu0 0.0
    %867 = vmatprep.subr.mxu0 0.0
    %868 = vmatpush1.msra.mxu0 0.0
    %869 = vmatprep.subr.mxu0 0.0
    %870 = vmatpush1.msra.mxu0 0.0
    %871 = vmatprep.subr.mxu0 0.0
    %872 = vmatpush1.msra.mxu0 0.0
    %873 = vmatprep.mubr.f32.mxu0 0.0
    %874 = vmatmul.mubr.f32.gmra.mrb[0].mxu0 %v762
    %v875 = vpop.f32.mrb[0].mxu0
    %v876 = vadd.f32 0.0, %v875
    %v877 = vpop.f32.mrb[0].mxu0
    %878 = vmatprep.mubr.f32.mxu0 0.0
    %879 = vmatmul.mubr.f32.gmra.mrb[0].mxu0 %v765
    %v880 = vpop.f32.mrb[0].mxu0
    %v881 = vadd.f32 0.0, %v880
    %v882 = vpop.f32.mrb[0].mxu0
    %883 = vmatprep.mubr.f32.mxu0 0.0
    %884 = vmatmul.mubr.f32.gmra.mrb[0].mxu0 %v768
    %v885 = vpop.f32.mrb[0].mxu0
    %v886 = vadd.f32 0.0, %v885
    %v887 = vpop.f32.mrb[0].mxu0
    %888 = vmatprep.mubr.f32.mxu0 0.0
    %889 = vmatmul.mubr.f32.gmra.mrb[0].mxu0 %v771
    %v890 = vpop.f32.mrb[0].mxu0
    %v891 = vadd.f32 0.0, %v890
    %v892 = vpop.f32.mrb[0].mxu0
    %893 = vmatprep.mubr.f32.mxu0 0.0
    %894 = vmatmul.mubr.f32.gmra.mrb[0].mxu0 %v774
    %v895 = vpop.f32.mrb[0].mxu0
    %v896 = vadd.f32 0.0, %v895
    %v897 = vpop.f32.mrb[0].mxu0
    %898 = vmatprep.mubr.f32.mxu0 0.0
    %899 = vmatmul.mubr.f32.gmra.mrb[0].mxu0 %v777
    %v900 = vpop.f32.mrb[0].mxu0
    %v901 = vadd.f32 0.0, %v900
    %v902 = vpop.f32.mrb[0].mxu0
    %903 = vmatprep.mubr.f32.mxu0 0.0
    %904 = vmatmul.mubr.f32.gmra.mrb[0].mxu0 %v780
    %v905 = vpop.f32.mrb[0].mxu0
    %v906 = vadd.f32 0.0, %v905
    %v907 = vpop.f32.mrb[0].mxu0
    %908 = vmatprep.mubr.f32.mxu0 0.0
    %909 = vmatmul.mubr.f32.gmra.mrb[0].mxu0 %v783
    %v910 = vpop.f32.mrb[0].mxu0
    %v911 = vadd.f32 0.0, %v910
    %v912 = vpop.f32.mrb[0].mxu0
    %913 = vmatprep.mubr.f32.mxu0 0.0
    %914 = vmatmul.mubr.f32.gmra.mrb[0].mxu0 %v786
    %v915 = vpop.f32.mrb[0].mxu0
    %v916 = vadd.f32 0.0, %v915
    %v917 = vpop.f32.mrb[0].mxu0
    %918 = vmatprep.mubr.f32.mxu0 0.0
    %919 = vmatmul.mubr.f32.gmra.mrb[0].mxu0 %v789
    %v920 = vpop.f32.mrb[0].mxu0
    %v921 = vadd.f32 0.0, %v920
    %v922 = vpop.f32.mrb[0].mxu0
    %923 = vmatprep.mubr.f32.mxu0 0.0
    %924 = vmatmul.mubr.f32.gmra.mrb[0].mxu0 %v792
    %v925 = vpop.f32.mrb[0].mxu0
    %v926 = vadd.f32 0.0, %v925
    %v927 = vpop.f32.mrb[0].mxu0
    %928 = vmatprep.mubr.f32.mxu0 0.0
    %929 = vmatmul.mubr.f32.gmra.mrb[0].mxu0 %v795
    %v930 = vpop.f32.mrb[0].mxu0
    %v931 = vadd.f32 0.0, %v930
    %v932 = vpop.f32.mrb[0].mxu0
    %933 = vmatprep.mubr.f32.mxu0 0.0
    %934 = vmatmul.mubr.f32.gmra.mrb[0].mxu0 %v798
    %v935 = vpop.f32.mrb[0].mxu0
    %v936 = vadd.f32 0.0, %v935
    %v937 = vpop.f32.mrb[0].mxu0
    %938 = vmatprep.mubr.f32.mxu0 0.0
    %939 = vmatmul.mubr.f32.gmra.mrb[0].mxu0 %v801
    %v940 = vpop.f32.mrb[0].mxu0
    %v941 = vadd.f32 0.0, %v940
    %v942 = vpop.f32.mrb[0].mxu0
    %943 = vmatprep.mubr.f32.mxu0 0.0
    %944 = vmatmul.mubr.f32.gmra.mrb[0].mxu0 %v804
    %v945 = vpop.f32.mrb[0].mxu0
    %v946 = vadd.f32 0.0, %v945
    %v947 = vpop.f32.mrb[0].mxu0
    %948 = vmatprep.mubr.f32.mxu0 0.0
    %949 = vmatmul.mubr.f32.gmra.mrb[0].mxu0 %v807
    %v950 = vpop.f32.mrb[0].mxu0
    %v951 = vadd.f32 0.0, %v950
    %v952 = vpop.f32.mrb[0].mxu0
    %953 = vdwg.mxu0
    %954 = vmatprep.subr.mxu0 0.0
    %955 = vmatpush1.msra.mxu0 %v876
    %956 = vmatprep.subr.mxu0 0.0
    %957 = vmatpush1.msra.mxu0 %v881
    %958 = vmatprep.subr.mxu0 0.0
    %959 = vmatpush1.msra.mxu0 %v886
    %960 = vmatprep.subr.mxu0 0.0
    %961 = vmatpush1.msra.mxu0 %v891
    %962 = vmatprep.subr.mxu0 0.0
    %963 = vmatpush1.msra.mxu0 %v896
    %964 = vmatprep.subr.mxu0 0.0
    %965 = vmatpush1.msra.mxu0 %v901
    %966 = vmatprep.subr.mxu0 0.0
    %967 = vmatpush1.msra.mxu0 %v906
    %968 = vmatprep.subr.mxu0 0.0
    %969 = vmatpush1.msra.mxu0 %v911
    %970 = vmatprep.subr.mxu0 0.0
    %971 = vmatpush1.msra.mxu0 %v916
    %972 = vmatprep.subr.mxu0 0.0
    %973 = vmatpush1.msra.mxu0 %v921
    %974 = vmatprep.subr.mxu0 0.0
    %975 = vmatpush1.msra.mxu0 %v926
    %976 = vmatprep.subr.mxu0 0.0
    %977 = vmatpush1.msra.mxu0 %v931
    %978 = vmatprep.subr.mxu0 0.0
    %979 = vmatpush1.msra.mxu0 %v936
    %980 = vmatprep.subr.mxu0 0.0
    %981 = vmatpush1.msra.mxu0 %v941
    %982 = vmatprep.subr.mxu0 0.0
    %983 = vmatpush1.msra.mxu0 %v946
    %984 = vmatprep.subr.mxu0 0.0
    %985 = vmatpush1.msra.mxu0 %v951
    %986 = vmatprep.subr.mxu0 0.0
    %987 = vmatpush1.msra.mxu0 0.0
    %988 = vmatprep.subr.mxu0 0.0
    %989 = vmatpush1.msra.mxu0 0.0
    %990 = vmatprep.subr.mxu0 0.0
    %991 = vmatpush1.msra.mxu0 0.0
    %992 = vmatprep.subr.mxu0 0.0
    %993 = vmatpush1.msra.mxu0 0.0
    %994 = vmatprep.subr.mxu0 0.0
    %995 = vmatpush1.msra.mxu0 0.0
    %996 = vmatprep.subr.mxu0 0.0
    %997 = vmatpush1.msra.mxu0 0.0
    %998 = vmatprep.subr.mxu0 0.0
    %999 = vmatpush1.msra.mxu0 0.0
    %1000 = vmatprep.subr.mxu0 0.0
    %1001 = vmatpush1.msra.mxu0 0.0
    %1002 = vmatprep.subr.mxu0 0.0
    %1003 = vmatpush1.msra.mxu0 0.0
    %1004 = vmatprep.subr.mxu0 0.0
    %1005 = vmatpush1.msra.mxu0 0.0
    %1006 = vmatprep.subr.mxu0 0.0
    %1007 = vmatpush1.msra.mxu0 0.0
    %1008 = vmatprep.subr.mxu0 0.0
    %1009 = vmatpush1.msra.mxu0 0.0
    %1010 = vmatprep.subr.mxu0 0.0
    %1011 = vmatpush1.msra.mxu0 0.0
    %1012 = vmatprep.subr.mxu0 0.0
    %1013 = vmatpush1.msra.mxu0 0.0
    %1014 = vmatprep.subr.mxu0 0.0
    %1015 = vmatpush1.msra.mxu0 0.0
    %1016 = vmatprep.subr.mxu0 0.0
    %1017 = vmatpush1.msra.mxu0 0.0
    %1018 = vmatprep.mubr.f32.mxu0 0.0
    %1019 = vmatmul.mubr.f32.gmra.mrb[0].mxu0 %v52
    %v1020 = vpop.f32.mrb[0].mxu0
    %v1021 = vadd.f32 0.0, %v1020
    %v1022 = vpop.f32.mrb[0].mxu0
    %1023 = vmatprep.mubr.f32.mxu0 0.0
    %1024 = vmatmul.mubr.f32.gmra.mrb[0].mxu0 %v53
    %v1025 = vpop.f32.mrb[0].mxu0
    %v1026 = vadd.f32 0.0, %v1025
    %v1027 = vpop.f32.mrb[0].mxu0
    %1028 = vmatprep.mubr.f32.mxu0 0.0
    %1029 = vmatmul.mubr.f32.gmra.mrb[0].mxu0 %v54
    %v1030 = vpop.f32.mrb[0].mxu0
    %v1031 = vadd.f32 0.0, %v1030
    %v1032 = vpop.f32.mrb[0].mxu0
    %1033 = vmatprep.mubr.f32.mxu0 0.0
    %1034 = vmatmul.mubr.f32.gmra.mrb[0].mxu0 %v55
    %v1035 = vpop.f32.mrb[0].mxu0
    %v1036 = vadd.f32 0.0, %v1035
    %v1037 = vpop.f32.mrb[0].mxu0
    %1038 = vmatprep.mubr.f32.mxu0 0.0
    %1039 = vmatmul.mubr.f32.gmra.mrb[0].mxu0 %v56
    %v1040 = vpop.f32.mrb[0].mxu0
    %v1041 = vadd.f32 0.0, %v1040
    %v1042 = vpop.f32.mrb[0].mxu0
    %1043 = vmatprep.mubr.f32.mxu0 0.0
    %1044 = vmatmul.mubr.f32.gmra.mrb[0].mxu0 %v57
    %v1045 = vpop.f32.mrb[0].mxu0
    %v1046 = vadd.f32 0.0, %v1045
    %v1047 = vpop.f32.mrb[0].mxu0
    %1048 = vmatprep.mubr.f32.mxu0 0.0
    %1049 = vmatmul.mubr.f32.gmra.mrb[0].mxu0 %v58
    %v1050 = vpop.f32.mrb[0].mxu0
    %v1051 = vadd.f32 0.0, %v1050
    %v1052 = vpop.f32.mrb[0].mxu0
    %1053 = vmatprep.mubr.f32.mxu0 0.0
    %1054 = vmatmul.mubr.f32.gmra.mrb[0].mxu0 %v59
    %v1055 = vpop.f32.mrb[0].mxu0
    %v1056 = vadd.f32 0.0, %v1055
    %v1057 = vpop.f32.mrb[0].mxu0
    %1058 = vmatprep.mubr.f32.mxu0 0.0
    %1059 = vmatmul.mubr.f32.gmra.mrb[0].mxu0 %v60
    %v1060 = vpop.f32.mrb[0].mxu0
    %v1061 = vadd.f32 0.0, %v1060
    %v1062 = vpop.f32.mrb[0].mxu0
    %1063 = vmatprep.mubr.f32.mxu0 0.0
    %1064 = vmatmul.mubr.f32.gmra.mrb[0].mxu0 %v61
    %v1065 = vpop.f32.mrb[0].mxu0
    %v1066 = vadd.f32 0.0, %v1065
    %v1067 = vpop.f32.mrb[0].mxu0
    %1068 = vmatprep.mubr.f32.mxu0 0.0
    %1069 = vmatmul.mubr.f32.gmra.mrb[0].mxu0 %v62
    %v1070 = vpop.f32.mrb[0].mxu0
    %v1071 = vadd.f32 0.0, %v1070
    %v1072 = vpop.f32.mrb[0].mxu0
    %1073 = vmatprep.mubr.f32.mxu0 0.0
    %1074 = vmatmul.mubr.f32.gmra.mrb[0].mxu0 %v63
    %v1075 = vpop.f32.mrb[0].mxu0
    %v1076 = vadd.f32 0.0, %v1075
    %v1077 = vpop.f32.mrb[0].mxu0
    %1078 = vmatprep.mubr.f32.mxu0 0.0
    %1079 = vmatmul.mubr.f32.gmra.mrb[0].mxu0 %v64
    %v1080 = vpop.f32.mrb[0].mxu0
    %v1081 = vadd.f32 0.0, %v1080
    %v1082 = vpop.f32.mrb[0].mxu0
    %1083 = vmatprep.mubr.f32.mxu0 0.0
    %1084 = vmatmul.mubr.f32.gmra.mrb[0].mxu0 %v65
    %v1085 = vpop.f32.mrb[0].mxu0
    %v1086 = vadd.f32 0.0, %v1085
    %v1087 = vpop.f32.mrb[0].mxu0
    %1088 = vmatprep.mubr.f32.mxu0 0.0
    %1089 = vmatmul.mubr.f32.gmra.mrb[0].mxu0 %v66
    %v1090 = vpop.f32.mrb[0].mxu0
    %v1091 = vadd.f32 0.0, %v1090
    %v1092 = vpop.f32.mrb[0].mxu0
    %1093 = vmatprep.mubr.f32.mxu0 0.0
    %1094 = vmatmul.mubr.f32.gmra.mrb[0].mxu0 %v67
    %v1095 = vpop.f32.mrb[0].mxu0
    %v1096 = vadd.f32 0.0, %v1095
    %v1097 = vpop.f32.mrb[0].mxu0
    %1098 = vdwg.mxu0
    %v1099 = vmul.f32 %v34, %v34
    %v1100 = vmul.f32 %v35, %v35
    %v1101 = vmul.f32 %v36, %v36
    %v1102 = vmul.f32 %v37, %v37
    %v1103 = vmul.f32 %v38, %v38
    %v1104 = vmul.f32 %v39, %v39
    %v1105 = vmul.f32 %v40, %v40
    %v1106 = vmul.f32 %v41, %v41
    %v1107 = vmul.f32 %v42, %v42
    %v1108 = vmul.f32 %v43, %v43
    %v1109 = vmul.f32 %v44, %v44
    %v1110 = vmul.f32 %v45, %v45
    %v1111 = vmul.f32 %v46, %v46
    %v1112 = vmul.f32 %v47, %v47
    %v1113 = vmul.f32 %v48, %v48
    %v1114 = vmul.f32 %v49, %v49
    %v1116 = vsel %vm68, %v1099, 0
    %v1119 = vsel %vm68, %v1100, 0
    %v1122 = vsel %vm68, %v1101, 0
    %v1125 = vsel %vm68, %v1102, 0
    %v1128 = vsel %vm68, %v1103, 0
    %v1131 = vsel %vm68, %v1104, 0
    %v1134 = vsel %vm68, %v1105, 0
    %v1137 = vsel %vm68, %v1106, 0
    %v1140 = vsel %vm68, %v1107, 0
    %v1143 = vsel %vm68, %v1108, 0
    %v1146 = vsel %vm68, %v1109, 0
    %v1149 = vsel %vm68, %v1110, 0
    %v1152 = vsel %vm68, %v1111, 0
    %v1155 = vsel %vm68, %v1112, 0
    %v1158 = vsel %vm68, %v1113, 0
    %v1161 = vsel %vm68, %v1114, 0
    %1163 = vmatprep.subr.mxu0 0.0
    %1164 = vmatpush1.msra.mxu0 %v50
    %1165 = vmatprep.subr.mxu0 0.0
    %1166 = vmatpush1.msra.mxu0 %v51
    %1167 = vmatprep.subr.mxu0 0.0
    %1168 = vmatpush1.msra.mxu0 0.0
    %1169 = vmatprep.subr.mxu0 0.0
    %1170 = vmatpush1.msra.mxu0 0.0
    %1171 = vmatprep.subr.mxu0 0.0
    %1172 = vmatpush1.msra.mxu0 0.0
    %1173 = vmatprep.subr.mxu0 0.0
    %1174 = vmatpush1.msra.mxu0 0.0
    %1175 = vmatprep.subr.mxu0 0.0
    %1176 = vmatpush1.msra.mxu0 0.0
    %1177 = vmatprep.subr.mxu0 0.0
    %1178 = vmatpush1.msra.mxu0 0.0
    %1179 = vmatprep.subr.mxu0 0.0
    %1180 = vmatpush1.msra.mxu0 0.0
    %1181 = vmatprep.subr.mxu0 0.0
    %1182 = vmatpush1.msra.mxu0 0.0
    %1183 = vmatprep.subr.mxu0 0.0
    %1184 = vmatpush1.msra.mxu0 0.0
    %1185 = vmatprep.subr.mxu0 0.0
    %1186 = vmatpush1.msra.mxu0 0.0
    %1187 = vmatprep.subr.mxu0 0.0
    %1188 = vmatpush1.msra.mxu0 0.0
    %1189 = vmatprep.subr.mxu0 0.0
    %1190 = vmatpush1.msra.mxu0 0.0
    %1191 = vmatprep.subr.mxu0 0.0
    %1192 = vmatpush1.msra.mxu0 0.0
    %1193 = vmatprep.subr.mxu0 0.0
    %1194 = vmatpush1.msra.mxu0 0.0
    %1195 = vmatprep.subr.mxu0 0.0
    %1196 = vmatpush1.msra.mxu0 0.0
    %1197 = vmatprep.subr.mxu0 0.0
    %1198 = vmatpush1.msra.mxu0 0.0
    %1199 = vmatprep.subr.mxu0 0.0
    %1200 = vmatpush1.msra.mxu0 0.0
    %1201 = vmatprep.subr.mxu0 0.0
    %1202 = vmatpush1.msra.mxu0 0.0
    %1203 = vmatprep.subr.mxu0 0.0
    %1204 = vmatpush1.msra.mxu0 0.0
    %1205 = vmatprep.subr.mxu0 0.0
    %1206 = vmatpush1.msra.mxu0 0.0
    %1207 = vmatprep.subr.mxu0 0.0
    %1208 = vmatpush1.msra.mxu0 0.0
    %1209 = vmatprep.subr.mxu0 0.0
    %1210 = vmatpush1.msra.mxu0 0.0
    %1211 = vmatprep.subr.mxu0 0.0
    %1212 = vmatpush1.msra.mxu0 0.0
    %1213 = vmatprep.subr.mxu0 0.0
    %1214 = vmatpush1.msra.mxu0 0.0
    %1215 = vmatprep.subr.mxu0 0.0
    %1216 = vmatpush1.msra.mxu0 0.0
    %1217 = vmatprep.subr.mxu0 0.0
    %1218 = vmatpush1.msra.mxu0 0.0
    %1219 = vmatprep.subr.mxu0 0.0
    %1220 = vmatpush1.msra.mxu0 0.0
    %1221 = vmatprep.subr.mxu0 0.0
    %1222 = vmatpush1.msra.mxu0 0.0
    %1223 = vmatprep.subr.mxu0 0.0
    %1224 = vmatpush1.msra.mxu0 0.0
    %1225 = vmatprep.subr.mxu0 0.0
    %1226 = vmatpush1.msra.mxu0 0.0
    %1227 = vmatprep.mubr.f32.mxu0 0.0
    %1228 = vmatmul.mubr.f32.gmra.mrb[0].mxu0 %v1116
    %v1229 = vpop.f32.mrb[0].mxu0
    %v1230 = vadd.f32 0.0, %v1229
    %v1231 = vpop.f32.mrb[0].mxu0
    %1232 = vmatprep.mubr.f32.mxu0 0.0
    %1233 = vmatmul.mubr.f32.gmra.mrb[0].mxu0 %v1119
    %v1234 = vpop.f32.mrb[0].mxu0
    %v1235 = vadd.f32 0.0, %v1234
    %v1236 = vpop.f32.mrb[0].mxu0
    %1237 = vmatprep.mubr.f32.mxu0 0.0
    %1238 = vmatmul.mubr.f32.gmra.mrb[0].mxu0 %v1122
    %v1239 = vpop.f32.mrb[0].mxu0
    %v1240 = vadd.f32 0.0, %v1239
    %v1241 = vpop.f32.mrb[0].mxu0
    %1242 = vmatprep.mubr.f32.mxu0 0.0
    %1243 = vmatmul.mubr.f32.gmra.mrb[0].mxu0 %v1125
    %v1244 = vpop.f32.mrb[0].mxu0
    %v1245 = vadd.f32 0.0, %v1244
    %v1246 = vpop.f32.mrb[0].mxu0
    %1247 = vmatprep.mubr.f32.mxu0 0.0
    %1248 = vmatmul.mubr.f32.gmra.mrb[0].mxu0 %v1128
    %v1249 = vpop.f32.mrb[0].mxu0
    %v1250 = vadd.f32 0.0, %v1249
    %v1251 = vpop.f32.mrb[0].mxu0
    %1252 = vmatprep.mubr.f32.mxu0 0.0
    %1253 = vmatmul.mubr.f32.gmra.mrb[0].mxu0 %v1131
    %v1254 = vpop.f32.mrb[0].mxu0
    %v1255 = vadd.f32 0.0, %v1254
    %v1256 = vpop.f32.mrb[0].mxu0
    %1257 = vmatprep.mubr.f32.mxu0 0.0
    %1258 = vmatmul.mubr.f32.gmra.mrb[0].mxu0 %v1134
    %v1259 = vpop.f32.mrb[0].mxu0
    %v1260 = vadd.f32 0.0, %v1259
    %v1261 = vpop.f32.mrb[0].mxu0
    %1262 = vmatprep.mubr.f32.mxu0 0.0
    %1263 = vmatmul.mubr.f32.gmra.mrb[0].mxu0 %v1137
    %v1264 = vpop.f32.mrb[0].mxu0
    %v1265 = vadd.f32 0.0, %v1264
    %v1266 = vpop.f32.mrb[0].mxu0
    %1267 = vmatprep.mubr.f32.mxu0 0.0
    %1268 = vmatmul.mubr.f32.gmra.mrb[0].mxu0 %v1140
    %v1269 = vpop.f32.mrb[0].mxu0
    %v1270 = vadd.f32 0.0, %v1269
    %v1271 = vpop.f32.mrb[0].mxu0
    %1272 = vmatprep.mubr.f32.mxu0 0.0
    %1273 = vmatmul.mubr.f32.gmra.mrb[0].mxu0 %v1143
    %v1274 = vpop.f32.mrb[0].mxu0
    %v1275 = vadd.f32 0.0, %v1274
    %v1276 = vpop.f32.mrb[0].mxu0
    %1277 = vmatprep.mubr.f32.mxu0 0.0
    %1278 = vmatmul.mubr.f32.gmra.mrb[0].mxu0 %v1146
    %v1279 = vpop.f32.mrb[0].mxu0
    %v1280 = vadd.f32 0.0, %v1279
    %v1281 = vpop.f32.mrb[0].mxu0
    %1282 = vmatprep.mubr.f32.mxu0 0.0
    %1283 = vmatmul.mubr.f32.gmra.mrb[0].mxu0 %v1149
    %v1284 = vpop.f32.mrb[0].mxu0
    %v1285 = vadd.f32 0.0, %v1284
    %v1286 = vpop.f32.mrb[0].mxu0
    %1287 = vmatprep.mubr.f32.mxu0 0.0
    %1288 = vmatmul.mubr.f32.gmra.mrb[0].mxu0 %v1152
    %v1289 = vpop.f32.mrb[0].mxu0
    %v1290 = vadd.f32 0.0, %v1289
    %v1291 = vpop.f32.mrb[0].mxu0
    %1292 = vmatprep.mubr.f32.mxu0 0.0
    %1293 = vmatmul.mubr.f32.gmra.mrb[0].mxu0 %v1155
    %v1294 = vpop.f32.mrb[0].mxu0
    %v1295 = vadd.f32 0.0, %v1294
    %v1296 = vpop.f32.mrb[0].mxu0
    %1297 = vmatprep.mubr.f32.mxu0 0.0
    %1298 = vmatmul.mubr.f32.gmra.mrb[0].mxu0 %v1158
    %v1299 = vpop.f32.mrb[0].mxu0
    %v1300 = vadd.f32 0.0, %v1299
    %v1301 = vpop.f32.mrb[0].mxu0
    %1302 = vmatprep.mubr.f32.mxu0 0.0
    %1303 = vmatmul.mubr.f32.gmra.mrb[0].mxu0 %v1161
    %v1304 = vpop.f32.mrb[0].mxu0
    %v1305 = vadd.f32 0.0, %v1304
    %v1306 = vpop.f32.mrb[0].mxu0
    %1307 = vdwg.mxu0
    %1308 = vmatprep.subr.mxu0 0.0
    %1309 = vmatpush1.msra.mxu0 %v1230
    %1310 = vmatprep.subr.mxu0 0.0
    %1311 = vmatpush1.msra.mxu0 %v1235
    %1312 = vmatprep.subr.mxu0 0.0
    %1313 = vmatpush1.msra.mxu0 %v1240
    %1314 = vmatprep.subr.mxu0 0.0
    %1315 = vmatpush1.msra.mxu0 %v1245
    %1316 = vmatprep.subr.mxu0 0.0
    %1317 = vmatpush1.msra.mxu0 %v1250
    %1318 = vmatprep.subr.mxu0 0.0
    %1319 = vmatpush1.msra.mxu0 %v1255
    %1320 = vmatprep.subr.mxu0 0.0
    %1321 = vmatpush1.msra.mxu0 %v1260
    %1322 = vmatprep.subr.mxu0 0.0
    %1323 = vmatpush1.msra.mxu0 %v1265
    %1324 = vmatprep.subr.mxu0 0.0
    %1325 = vmatpush1.msra.mxu0 %v1270
    %1326 = vmatprep.subr.mxu0 0.0
    %1327 = vmatpush1.msra.mxu0 %v1275
    %1328 = vmatprep.subr.mxu0 0.0
    %1329 = vmatpush1.msra.mxu0 %v1280
    %1330 = vmatprep.subr.mxu0 0.0
    %1331 = vmatpush1.msra.mxu0 %v1285
    %1332 = vmatprep.subr.mxu0 0.0
    %1333 = vmatpush1.msra.mxu0 %v1290
    %1334 = vmatprep.subr.mxu0 0.0
    %1335 = vmatpush1.msra.mxu0 %v1295
    %1336 = vmatprep.subr.mxu0 0.0
    %1337 = vmatpush1.msra.mxu0 %v1300
    %1338 = vmatprep.subr.mxu0 0.0
    %1339 = vmatpush1.msra.mxu0 %v1305
    %1340 = vmatprep.subr.mxu0 0.0
    %1341 = vmatpush1.msra.mxu0 0.0
    %1342 = vmatprep.subr.mxu0 0.0
    %1343 = vmatpush1.msra.mxu0 0.0
    %1344 = vmatprep.subr.mxu0 0.0
    %1345 = vmatpush1.msra.mxu0 0.0
    %1346 = vmatprep.subr.mxu0 0.0
    %1347 = vmatpush1.msra.mxu0 0.0
    %1348 = vmatprep.subr.mxu0 0.0
    %1349 = vmatpush1.msra.mxu0 0.0
    %1350 = vmatprep.subr.mxu0 0.0
    %1351 = vmatpush1.msra.mxu0 0.0
    %1352 = vmatprep.subr.mxu0 0.0
    %1353 = vmatpush1.msra.mxu0 0.0
    %1354 = vmatprep.subr.mxu0 0.0
    %1355 = vmatpush1.msra.mxu0 0.0
    %1356 = vmatprep.subr.mxu0 0.0
    %1357 = vmatpush1.msra.mxu0 0.0
    %1358 = vmatprep.subr.mxu0 0.0
    %1359 = vmatpush1.msra.mxu0 0.0
    %1360 = vmatprep.subr.mxu0 0.0
    %1361 = vmatpush1.msra.mxu0 0.0
    %1362 = vmatprep.subr.mxu0 0.0
    %1363 = vmatpush1.msra.mxu0 0.0
    %1364 = vmatprep.subr.mxu0 0.0
    %1365 = vmatpush1.msra.mxu0 0.0
    %1366 = vmatprep.subr.mxu0 0.0
    %1367 = vmatpush1.msra.mxu0 0.0
    %1368 = vmatprep.subr.mxu0 0.0
    %1369 = vmatpush1.msra.mxu0 0.0
    %1370 = vmatprep.subr.mxu0 0.0
    %1371 = vmatpush1.msra.mxu0 0.0
    %1372 = vmatprep.mubr.f32.mxu0 0.0
    %1373 = vmatmul.mubr.f32.gmra.mrb[0].mxu0 %v52
    %v1374 = vpop.f32.mrb[0].mxu0
    %v1375 = vadd.f32 0.0, %v1374
    %v1376 = vpop.f32.mrb[0].mxu0
    %1377 = vmatprep.mubr.f32.mxu0 0.0
    %1378 = vmatmul.mubr.f32.gmra.mrb[0].mxu0 %v53
    %v1379 = vpop.f32.mrb[0].mxu0
    %v1380 = vadd.f32 0.0, %v1379
    %v1381 = vpop.f32.mrb[0].mxu0
    %1382 = vmatprep.mubr.f32.mxu0 0.0
    %1383 = vmatmul.mubr.f32.gmra.mrb[0].mxu0 %v54
    %v1384 = vpop.f32.mrb[0].mxu0
    %v1385 = vadd.f32 0.0, %v1384
    %v1386 = vpop.f32.mrb[0].mxu0
    %1387 = vmatprep.mubr.f32.mxu0 0.0
    %1388 = vmatmul.mubr.f32.gmra.mrb[0].mxu0 %v55
    %v1389 = vpop.f32.mrb[0].mxu0
    %v1390 = vadd.f32 0.0, %v1389
    %v1391 = vpop.f32.mrb[0].mxu0
    %1392 = vmatprep.mubr.f32.mxu0 0.0
    %1393 = vmatmul.mubr.f32.gmra.mrb[0].mxu0 %v56
    %v1394 = vpop.f32.mrb[0].mxu0
    %v1395 = vadd.f32 0.0, %v1394
    %v1396 = vpop.f32.mrb[0].mxu0
    %1397 = vmatprep.mubr.f32.mxu0 0.0
    %1398 = vmatmul.mubr.f32.gmra.mrb[0].mxu0 %v57
    %v1399 = vpop.f32.mrb[0].mxu0
    %v1400 = vadd.f32 0.0, %v1399
    %v1401 = vpop.f32.mrb[0].mxu0
    %1402 = vmatprep.mubr.f32.mxu0 0.0
    %1403 = vmatmul.mubr.f32.gmra.mrb[0].mxu0 %v58
    %v1404 = vpop.f32.mrb[0].mxu0
    %v1405 = vadd.f32 0.0, %v1404
    %v1406 = vpop.f32.mrb[0].mxu0
    %1407 = vmatprep.mubr.f32.mxu0 0.0
    %1408 = vmatmul.mubr.f32.gmra.mrb[0].mxu0 %v59
    %v1409 = vpop.f32.mrb[0].mxu0
    %v1410 = vadd.f32 0.0, %v1409
    %v1411 = vpop.f32.mrb[0].mxu0
    %1412 = vmatprep.mubr.f32.mxu0 0.0
    %1413 = vmatmul.mubr.f32.gmra.mrb[0].mxu0 %v60
    %v1414 = vpop.f32.mrb[0].mxu0
    %v1415 = vadd.f32 0.0, %v1414
    %v1416 = vpop.f32.mrb[0].mxu0
    %1417 = vmatprep.mubr.f32.mxu0 0.0
    %1418 = vmatmul.mubr.f32.gmra.mrb[0].mxu0 %v61
    %v1419 = vpop.f32.mrb[0].mxu0
    %v1420 = vadd.f32 0.0, %v1419
    %v1421 = vpop.f32.mrb[0].mxu0
    %1422 = vmatprep.mubr.f32.mxu0 0.0
    %1423 = vmatmul.mubr.f32.gmra.mrb[0].mxu0 %v62
    %v1424 = vpop.f32.mrb[0].mxu0
    %v1425 = vadd.f32 0.0, %v1424
    %v1426 = vpop.f32.mrb[0].mxu0
    %1427 = vmatprep.mubr.f32.mxu0 0.0
    %1428 = vmatmul.mubr.f32.gmra.mrb[0].mxu0 %v63
    %v1429 = vpop.f32.mrb[0].mxu0
    %v1430 = vadd.f32 0.0, %v1429
    %v1431 = vpop.f32.mrb[0].mxu0
    %1432 = vmatprep.mubr.f32.mxu0 0.0
    %1433 = vmatmul.mubr.f32.gmra.mrb[0].mxu0 %v64
    %v1434 = vpop.f32.mrb[0].mxu0
    %v1435 = vadd.f32 0.0, %v1434
    %v1436 = vpop.f32.mrb[0].mxu0
    %1437 = vmatprep.mubr.f32.mxu0 0.0
    %1438 = vmatmul.mubr.f32.gmra.mrb[0].mxu0 %v65
    %v1439 = vpop.f32.mrb[0].mxu0
    %v1440 = vadd.f32 0.0, %v1439
    %v1441 = vpop.f32.mrb[0].mxu0
    %1442 = vmatprep.mubr.f32.mxu0 0.0
    %1443 = vmatmul.mubr.f32.gmra.mrb[0].mxu0 %v66
    %v1444 = vpop.f32.mrb[0].mxu0
    %v1445 = vadd.f32 0.0, %v1444
    %v1446 = vpop.f32.mrb[0].mxu0
    %1447 = vmatprep.mubr.f32.mxu0 0.0
    %1448 = vmatmul.mubr.f32.gmra.mrb[0].mxu0 %v67
    %v1449 = vpop.f32.mrb[0].mxu0
    %v1450 = vadd.f32 0.0, %v1449
    %v1451 = vpop.f32.mrb[0].mxu0
    %1452 = vdwg.mxu0
    %v1453 = vmul.f32 %v18, %v34
    %v1454 = vmul.f32 %v19, %v35
    %v1455 = vmul.f32 %v20, %v36
    %v1456 = vmul.f32 %v21, %v37
    %v1457 = vmul.f32 %v22, %v38
    %v1458 = vmul.f32 %v23, %v39
    %v1459 = vmul.f32 %v24, %v40
    %v1460 = vmul.f32 %v25, %v41
    %v1461 = vmul.f32 %v26, %v42
    %v1462 = vmul.f32 %v27, %v43
    %v1463 = vmul.f32 %v28, %v44
    %v1464 = vmul.f32 %v29, %v45
    %v1465 = vmul.f32 %v30, %v46
    %v1466 = vmul.f32 %v31, %v47
    %v1467 = vmul.f32 %v32, %v48
    %v1468 = vmul.f32 %v33, %v49
    %v1470 = vsel %vm68, %v1453, 0
    %v1473 = vsel %vm68, %v1454, 0
    %v1476 = vsel %vm68, %v1455, 0
    %v1479 = vsel %vm68, %v1456, 0
    %v1482 = vsel %vm68, %v1457, 0
    %v1485 = vsel %vm68, %v1458, 0
    %v1488 = vsel %vm68, %v1459, 0
    %v1491 = vsel %vm68, %v1460, 0
    %v1494 = vsel %vm68, %v1461, 0
    %v1497 = vsel %vm68, %v1462, 0
    %v1500 = vsel %vm68, %v1463, 0
    %v1503 = vsel %vm68, %v1464, 0
    %v1506 = vsel %vm68, %v1465, 0
    %v1509 = vsel %vm68, %v1466, 0
    %v1512 = vsel %vm68, %v1467, 0
    %v1515 = vsel %vm68, %v1468, 0
    %1517 = vmatprep.subr.mxu0 0.0
    %1518 = vmatpush1.msra.mxu0 %v50
    %1519 = vmatprep.subr.mxu0 0.0
    %1520 = vmatpush1.msra.mxu0 %v51
    %1521 = vmatprep.subr.mxu0 0.0
    %1522 = vmatpush1.msra.mxu0 0.0
    %1523 = vmatprep.subr.mxu0 0.0
    %1524 = vmatpush1.msra.mxu0 0.0
    %1525 = vmatprep.subr.mxu0 0.0
    %1526 = vmatpush1.msra.mxu0 0.0
    %1527 = vmatprep.subr.mxu0 0.0
    %1528 = vmatpush1.msra.mxu0 0.0
    %1529 = vmatprep.subr.mxu0 0.0
    %1530 = vmatpush1.msra.mxu0 0.0
    %1531 = vmatprep.subr.mxu0 0.0
    %1532 = vmatpush1.msra.mxu0 0.0
    %1533 = vmatprep.subr.mxu0 0.0
    %1534 = vmatpush1.msra.mxu0 0.0
    %1535 = vmatprep.subr.mxu0 0.0
    %1536 = vmatpush1.msra.mxu0 0.0
    %1537 = vmatprep.subr.mxu0 0.0
    %1538 = vmatpush1.msra.mxu0 0.0
    %1539 = vmatprep.subr.mxu0 0.0
    %1540 = vmatpush1.msra.mxu0 0.0
    %1541 = vmatprep.subr.mxu0 0.0
    %1542 = vmatpush1.msra.mxu0 0.0
    %1543 = vmatprep.subr.mxu0 0.0
    %1544 = vmatpush1.msra.mxu0 0.0
    %1545 = vmatprep.subr.mxu0 0.0
    %1546 = vmatpush1.msra.mxu0 0.0
    %1547 = vmatprep.subr.mxu0 0.0
    %1548 = vmatpush1.msra.mxu0 0.0
    %1549 = vmatprep.subr.mxu0 0.0
    %1550 = vmatpush1.msra.mxu0 0.0
    %1551 = vmatprep.subr.mxu0 0.0
    %1552 = vmatpush1.msra.mxu0 0.0
    %1553 = vmatprep.subr.mxu0 0.0
    %1554 = vmatpush1.msra.mxu0 0.0
    %1555 = vmatprep.subr.mxu0 0.0
    %1556 = vmatpush1.msra.mxu0 0.0
    %1557 = vmatprep.subr.mxu0 0.0
    %1558 = vmatpush1.msra.mxu0 0.0
    %1559 = vmatprep.subr.mxu0 0.0
    %1560 = vmatpush1.msra.mxu0 0.0
    %1561 = vmatprep.subr.mxu0 0.0
    %1562 = vmatpush1.msra.mxu0 0.0
    %1563 = vmatprep.subr.mxu0 0.0
    %1564 = vmatpush1.msra.mxu0 0.0
    %1565 = vmatprep.subr.mxu0 0.0
    %1566 = vmatpush1.msra.mxu0 0.0
    %1567 = vmatprep.subr.mxu0 0.0
    %1568 = vmatpush1.msra.mxu0 0.0
    %1569 = vmatprep.subr.mxu0 0.0
    %1570 = vmatpush1.msra.mxu0 0.0
    %1571 = vmatprep.subr.mxu0 0.0
    %1572 = vmatpush1.msra.mxu0 0.0
    %1573 = vmatprep.subr.mxu0 0.0
    %1574 = vmatpush1.msra.mxu0 0.0
    %1575 = vmatprep.subr.mxu0 0.0
    %1576 = vmatpush1.msra.mxu0 0.0
    %1577 = vmatprep.subr.mxu0 0.0
    %1578 = vmatpush1.msra.mxu0 0.0
    %1579 = vmatprep.subr.mxu0 0.0
    %1580 = vmatpush1.msra.mxu0 0.0
    %1581 = vmatprep.mubr.f32.mxu0 0.0
    %1582 = vmatmul.mubr.f32.gmra.mrb[0].mxu0 %v1470
    %v1583 = vpop.f32.mrb[0].mxu0
    %v1584 = vadd.f32 0.0, %v1583
    %v1585 = vpop.f32.mrb[0].mxu0
    %1586 = vmatprep.mubr.f32.mxu0 0.0
    %1587 = vmatmul.mubr.f32.gmra.mrb[0].mxu0 %v1473
    %v1588 = vpop.f32.mrb[0].mxu0
    %v1589 = vadd.f32 0.0, %v1588
    %v1590 = vpop.f32.mrb[0].mxu0
    %1591 = vmatprep.mubr.f32.mxu0 0.0
    %1592 = vmatmul.mubr.f32.gmra.mrb[0].mxu0 %v1476
    %v1593 = vpop.f32.mrb[0].mxu0
    %v1594 = vadd.f32 0.0, %v1593
    %v1595 = vpop.f32.mrb[0].mxu0
    %1596 = vmatprep.mubr.f32.mxu0 0.0
    %1597 = vmatmul.mubr.f32.gmra.mrb[0].mxu0 %v1479
    %v1598 = vpop.f32.mrb[0].mxu0
    %v1599 = vadd.f32 0.0, %v1598
    %v1600 = vpop.f32.mrb[0].mxu0
    %1601 = vmatprep.mubr.f32.mxu0 0.0
    %1602 = vmatmul.mubr.f32.gmra.mrb[0].mxu0 %v1482
    %v1603 = vpop.f32.mrb[0].mxu0
    %v1604 = vadd.f32 0.0, %v1603
    %v1605 = vpop.f32.mrb[0].mxu0
    %1606 = vmatprep.mubr.f32.mxu0 0.0
    %1607 = vmatmul.mubr.f32.gmra.mrb[0].mxu0 %v1485
    %v1608 = vpop.f32.mrb[0].mxu0
    %v1609 = vadd.f32 0.0, %v1608
    %v1610 = vpop.f32.mrb[0].mxu0
    %1611 = vmatprep.mubr.f32.mxu0 0.0
    %1612 = vmatmul.mubr.f32.gmra.mrb[0].mxu0 %v1488
    %v1613 = vpop.f32.mrb[0].mxu0
    %v1614 = vadd.f32 0.0, %v1613
    %v1615 = vpop.f32.mrb[0].mxu0
    %1616 = vmatprep.mubr.f32.mxu0 0.0
    %1617 = vmatmul.mubr.f32.gmra.mrb[0].mxu0 %v1491
    %v1618 = vpop.f32.mrb[0].mxu0
    %v1619 = vadd.f32 0.0, %v1618
    %v1620 = vpop.f32.mrb[0].mxu0
    %1621 = vmatprep.mubr.f32.mxu0 0.0
    %1622 = vmatmul.mubr.f32.gmra.mrb[0].mxu0 %v1494
    %v1623 = vpop.f32.mrb[0].mxu0
    %v1624 = vadd.f32 0.0, %v1623
    %v1625 = vpop.f32.mrb[0].mxu0
    %1626 = vmatprep.mubr.f32.mxu0 0.0
    %1627 = vmatmul.mubr.f32.gmra.mrb[0].mxu0 %v1497
    %v1628 = vpop.f32.mrb[0].mxu0
    %v1629 = vadd.f32 0.0, %v1628
    %v1630 = vpop.f32.mrb[0].mxu0
    %1631 = vmatprep.mubr.f32.mxu0 0.0
    %1632 = vmatmul.mubr.f32.gmra.mrb[0].mxu0 %v1500
    %v1633 = vpop.f32.mrb[0].mxu0
    %v1634 = vadd.f32 0.0, %v1633
    %v1635 = vpop.f32.mrb[0].mxu0
    %1636 = vmatprep.mubr.f32.mxu0 0.0
    %1637 = vmatmul.mubr.f32.gmra.mrb[0].mxu0 %v1503
    %v1638 = vpop.f32.mrb[0].mxu0
    %v1639 = vadd.f32 0.0, %v1638
    %v1640 = vpop.f32.mrb[0].mxu0
    %1641 = vmatprep.mubr.f32.mxu0 0.0
    %1642 = vmatmul.mubr.f32.gmra.mrb[0].mxu0 %v1506
    %v1643 = vpop.f32.mrb[0].mxu0
    %v1644 = vadd.f32 0.0, %v1643
    %v1645 = vpop.f32.mrb[0].mxu0
    %1646 = vmatprep.mubr.f32.mxu0 0.0
    %1647 = vmatmul.mubr.f32.gmra.mrb[0].mxu0 %v1509
    %v1648 = vpop.f32.mrb[0].mxu0
    %v1649 = vadd.f32 0.0, %v1648
    %v1650 = vpop.f32.mrb[0].mxu0
    %1651 = vmatprep.mubr.f32.mxu0 0.0
    %1652 = vmatmul.mubr.f32.gmra.mrb[0].mxu0 %v1512
    %v1653 = vpop.f32.mrb[0].mxu0
    %v1654 = vadd.f32 0.0, %v1653
    %v1655 = vpop.f32.mrb[0].mxu0
    %1656 = vmatprep.mubr.f32.mxu0 0.0
    %1657 = vmatmul.mubr.f32.gmra.mrb[0].mxu0 %v1515
    %v1658 = vpop.f32.mrb[0].mxu0
    %v1659 = vadd.f32 0.0, %v1658
    %v1660 = vpop.f32.mrb[0].mxu0
    %1661 = vdwg.mxu0
    %1662 = vmatprep.subr.mxu0 0.0
    %1663 = vmatpush1.msra.mxu0 %v1584
    %1664 = vmatprep.subr.mxu0 0.0
    %1665 = vmatpush1.msra.mxu0 %v1589
    %1666 = vmatprep.subr.mxu0 0.0
    %1667 = vmatpush1.msra.mxu0 %v1594
    %1668 = vmatprep.subr.mxu0 0.0
    %1669 = vmatpush1.msra.mxu0 %v1599
    %1670 = vmatprep.subr.mxu0 0.0
    %1671 = vmatpush1.msra.mxu0 %v1604
    %1672 = vmatprep.subr.mxu0 0.0
    %1673 = vmatpush1.msra.mxu0 %v1609
    %1674 = vmatprep.subr.mxu0 0.0
    %1675 = vmatpush1.msra.mxu0 %v1614
    %1676 = vmatprep.subr.mxu0 0.0
    %1677 = vmatpush1.msra.mxu0 %v1619
    %1678 = vmatprep.subr.mxu0 0.0
    %1679 = vmatpush1.msra.mxu0 %v1624
    %1680 = vmatprep.subr.mxu0 0.0
    %1681 = vmatpush1.msra.mxu0 %v1629
    %1682 = vmatprep.subr.mxu0 0.0
    %1683 = vmatpush1.msra.mxu0 %v1634
    %1684 = vmatprep.subr.mxu0 0.0
    %1685 = vmatpush1.msra.mxu0 %v1639
    %1686 = vmatprep.subr.mxu0 0.0
    %1687 = vmatpush1.msra.mxu0 %v1644
    %1688 = vmatprep.subr.mxu0 0.0
    %1689 = vmatpush1.msra.mxu0 %v1649
    %1690 = vmatprep.subr.mxu0 0.0
    %1691 = vmatpush1.msra.mxu0 %v1654
    %1692 = vmatprep.subr.mxu0 0.0
    %1693 = vmatpush1.msra.mxu0 %v1659
    %1694 = vmatprep.subr.mxu0 0.0
    %1695 = vmatpush1.msra.mxu0 0.0
    %1696 = vmatprep.subr.mxu0 0.0
    %1697 = vmatpush1.msra.mxu0 0.0
    %1698 = vmatprep.subr.mxu0 0.0
    %1699 = vmatpush1.msra.mxu0 0.0
    %1700 = vmatprep.subr.mxu0 0.0
    %1701 = vmatpush1.msra.mxu0 0.0
    %1702 = vmatprep.subr.mxu0 0.0
    %1703 = vmatpush1.msra.mxu0 0.0
    %1704 = vmatprep.subr.mxu0 0.0
    %1705 = vmatpush1.msra.mxu0 0.0
    %1706 = vmatprep.subr.mxu0 0.0
    %1707 = vmatpush1.msra.mxu0 0.0
    %1708 = vmatprep.subr.mxu0 0.0
    %1709 = vmatpush1.msra.mxu0 0.0
    %1710 = vmatprep.subr.mxu0 0.0
    %1711 = vmatpush1.msra.mxu0 0.0
    %1712 = vmatprep.subr.mxu0 0.0
    %1713 = vmatpush1.msra.mxu0 0.0
    %1714 = vmatprep.subr.mxu0 0.0
    %1715 = vmatpush1.msra.mxu0 0.0
    %1716 = vmatprep.subr.mxu0 0.0
    %1717 = vmatpush1.msra.mxu0 0.0
    %1718 = vmatprep.subr.mxu0 0.0
    %1719 = vmatpush1.msra.mxu0 0.0
    %1720 = vmatprep.subr.mxu0 0.0
    %1721 = vmatpush1.msra.mxu0 0.0
    %1722 = vmatprep.subr.mxu0 0.0
    %1723 = vmatpush1.msra.mxu0 0.0
    %1724 = vmatprep.subr.mxu0 0.0
    %1725 = vmatpush1.msra.mxu0 0.0
    %1726 = vmatprep.mubr.f32.mxu0 0.0
    %1727 = vmatmul.mubr.f32.gmra.mrb[0].mxu0 %v52
    %v1728 = vpop.f32.mrb[0].mxu0
    %v1729 = vadd.f32 0.0, %v1728
    %v1730 = vpop.f32.mrb[0].mxu0
    %1731 = vmatprep.mubr.f32.mxu0 0.0
    %1732 = vmatmul.mubr.f32.gmra.mrb[0].mxu0 %v53
    %v1733 = vpop.f32.mrb[0].mxu0
    %v1734 = vadd.f32 0.0, %v1733
    %v1735 = vpop.f32.mrb[0].mxu0
    %1736 = vmatprep.mubr.f32.mxu0 0.0
    %1737 = vmatmul.mubr.f32.gmra.mrb[0].mxu0 %v54
    %v1738 = vpop.f32.mrb[0].mxu0
    %v1739 = vadd.f32 0.0, %v1738
    %v1740 = vpop.f32.mrb[0].mxu0
    %1741 = vmatprep.mubr.f32.mxu0 0.0
    %1742 = vmatmul.mubr.f32.gmra.mrb[0].mxu0 %v55
    %v1743 = vpop.f32.mrb[0].mxu0
    %v1744 = vadd.f32 0.0, %v1743
    %v1745 = vpop.f32.mrb[0].mxu0
    %1746 = vmatprep.mubr.f32.mxu0 0.0
    %1747 = vmatmul.mubr.f32.gmra.mrb[0].mxu0 %v56
    %v1748 = vpop.f32.mrb[0].mxu0
    %v1749 = vadd.f32 0.0, %v1748
    %v1750 = vpop.f32.mrb[0].mxu0
    %1751 = vmatprep.mubr.f32.mxu0 0.0
    %1752 = vmatmul.mubr.f32.gmra.mrb[0].mxu0 %v57
    %v1753 = vpop.f32.mrb[0].mxu0
    %v1754 = vadd.f32 0.0, %v1753
    %v1755 = vpop.f32.mrb[0].mxu0
    %1756 = vmatprep.mubr.f32.mxu0 0.0
    %1757 = vmatmul.mubr.f32.gmra.mrb[0].mxu0 %v58
    %v1758 = vpop.f32.mrb[0].mxu0
    %v1759 = vadd.f32 0.0, %v1758
    %v1760 = vpop.f32.mrb[0].mxu0
    %1761 = vmatprep.mubr.f32.mxu0 0.0
    %1762 = vmatmul.mubr.f32.gmra.mrb[0].mxu0 %v59
    %v1763 = vpop.f32.mrb[0].mxu0
    %v1764 = vadd.f32 0.0, %v1763
    %v1765 = vpop.f32.mrb[0].mxu0
    %1766 = vmatprep.mubr.f32.mxu0 0.0
    %1767 = vmatmul.mubr.f32.gmra.mrb[0].mxu0 %v60
    %v1768 = vpop.f32.mrb[0].mxu0
    %v1769 = vadd.f32 0.0, %v1768
    %v1770 = vpop.f32.mrb[0].mxu0
    %1771 = vmatprep.mubr.f32.mxu0 0.0
    %1772 = vmatmul.mubr.f32.gmra.mrb[0].mxu0 %v61
    %v1773 = vpop.f32.mrb[0].mxu0
    %v1774 = vadd.f32 0.0, %v1773
    %v1775 = vpop.f32.mrb[0].mxu0
    %1776 = vmatprep.mubr.f32.mxu0 0.0
    %1777 = vmatmul.mubr.f32.gmra.mrb[0].mxu0 %v62
    %v1778 = vpop.f32.mrb[0].mxu0
    %v1779 = vadd.f32 0.0, %v1778
    %v1780 = vpop.f32.mrb[0].mxu0
    %1781 = vmatprep.mubr.f32.mxu0 0.0
    %1782 = vmatmul.mubr.f32.gmra.mrb[0].mxu0 %v63
    %v1783 = vpop.f32.mrb[0].mxu0
    %v1784 = vadd.f32 0.0, %v1783
    %v1785 = vpop.f32.mrb[0].mxu0
    %1786 = vmatprep.mubr.f32.mxu0 0.0
    %1787 = vmatmul.mubr.f32.gmra.mrb[0].mxu0 %v64
    %v1788 = vpop.f32.mrb[0].mxu0
    %v1789 = vadd.f32 0.0, %v1788
    %v1790 = vpop.f32.mrb[0].mxu0
    %1791 = vmatprep.mubr.f32.mxu0 0.0
    %1792 = vmatmul.mubr.f32.gmra.mrb[0].mxu0 %v65
    %v1793 = vpop.f32.mrb[0].mxu0
    %v1794 = vadd.f32 0.0, %v1793
    %v1795 = vpop.f32.mrb[0].mxu0
    %1796 = vmatprep.mubr.f32.mxu0 0.0
    %1797 = vmatmul.mubr.f32.gmra.mrb[0].mxu0 %v66
    %v1798 = vpop.f32.mrb[0].mxu0
    %v1799 = vadd.f32 0.0, %v1798
    %v1800 = vpop.f32.mrb[0].mxu0
    %1801 = vmatprep.mubr.f32.mxu0 0.0
    %1802 = vmatmul.mubr.f32.gmra.mrb[0].mxu0 %v67
    %v1803 = vpop.f32.mrb[0].mxu0
    %v1804 = vadd.f32 0.0, %v1803
    %v1805 = vpop.f32.mrb[0].mxu0
    %1806 = vdwg.mxu0
    %v1807 = vmul.f32 %v329, %v329
    %v1808 = vmul.f32 %v334, %v334
    %v1809 = vmul.f32 %v339, %v339
    %v1810 = vmul.f32 %v344, %v344
    %v1811 = vmul.f32 %v349, %v349
    %v1812 = vmul.f32 %v354, %v354
    %v1813 = vmul.f32 %v359, %v359
    %v1814 = vmul.f32 %v364, %v364
    %v1815 = vmul.f32 %v369, %v369
    %v1816 = vmul.f32 %v374, %v374
    %v1817 = vmul.f32 %v379, %v379
    %v1818 = vmul.f32 %v384, %v384
    %v1819 = vmul.f32 %v389, %v389
    %v1820 = vmul.f32 %v394, %v394
    %v1821 = vmul.f32 %v399, %v399
    %v1822 = vmul.f32 %v404, %v404
    %v1823 = vmul.f32 %v667, %v667
    %v1824 = vmul.f32 %v672, %v672
    %v1825 = vmul.f32 %v677, %v677
    %v1826 = vmul.f32 %v682, %v682
    %v1827 = vmul.f32 %v687, %v687
    %v1828 = vmul.f32 %v692, %v692
    %v1829 = vmul.f32 %v697, %v697
    %v1830 = vmul.f32 %v702, %v702
    %v1831 = vmul.f32 %v707, %v707
    %v1832 = vmul.f32 %v712, %v712
    %v1833 = vmul.f32 %v717, %v717
    %v1834 = vmul.f32 %v722, %v722
    %v1835 = vmul.f32 %v727, %v727
    %v1836 = vmul.f32 %v732, %v732
    %v1837 = vmul.f32 %v737, %v737
    %v1838 = vmul.f32 %v742, %v742
    %v1839 = vmul.f32 %v329, %v667
    %v1840 = vmul.f32 %v334, %v672
    %v1841 = vmul.f32 %v339, %v677
    %v1842 = vmul.f32 %v344, %v682
    %v1843 = vmul.f32 %v349, %v687
    %v1844 = vmul.f32 %v354, %v692
    %v1845 = vmul.f32 %v359, %v697
    %v1846 = vmul.f32 %v364, %v702
    %v1847 = vmul.f32 %v369, %v707
    %v1848 = vmul.f32 %v374, %v712
    %v1849 = vmul.f32 %v379, %v717
    %v1850 = vmul.f32 %v384, %v722
    %v1851 = vmul.f32 %v389, %v727
    %v1852 = vmul.f32 %v394, %v732
    %v1853 = vmul.f32 %v399, %v737
    %v1854 = vmul.f32 %v404, %v742
    %v1855 = vsub.f32 %v1021, %v1807
    %v1856 = vsub.f32 %v1026, %v1808
    %v1857 = vsub.f32 %v1031, %v1809
    %v1858 = vsub.f32 %v1036, %v1810
    %v1859 = vsub.f32 %v1041, %v1811
    %v1860 = vsub.f32 %v1046, %v1812
    %v1861 = vsub.f32 %v1051, %v1813
    %v1862 = vsub.f32 %v1056, %v1814
    %v1863 = vsub.f32 %v1061, %v1815
    %v1864 = vsub.f32 %v1066, %v1816
    %v1865 = vsub.f32 %v1071, %v1817
    %v1866 = vsub.f32 %v1076, %v1818
    %v1867 = vsub.f32 %v1081, %v1819
    %v1868 = vsub.f32 %v1086, %v1820
    %v1869 = vsub.f32 %v1091, %v1821
    %v1870 = vsub.f32 %v1096, %v1822
    %v1871 = vsub.f32 %v1375, %v1823
    %v1872 = vsub.f32 %v1380, %v1824
    %v1873 = vsub.f32 %v1385, %v1825
    %v1874 = vsub.f32 %v1390, %v1826
    %v1875 = vsub.f32 %v1395, %v1827
    %v1876 = vsub.f32 %v1400, %v1828
    %v1877 = vsub.f32 %v1405, %v1829
    %v1878 = vsub.f32 %v1410, %v1830
    %v1879 = vsub.f32 %v1415, %v1831
    %v1880 = vsub.f32 %v1420, %v1832
    %v1881 = vsub.f32 %v1425, %v1833
    %v1882 = vsub.f32 %v1430, %v1834
    %v1883 = vsub.f32 %v1435, %v1835
    %v1884 = vsub.f32 %v1440, %v1836
    %v1885 = vsub.f32 %v1445, %v1837
    %v1886 = vsub.f32 %v1450, %v1838
    %v1887 = vsub.f32 %v1729, %v1839
    %v1888 = vsub.f32 %v1734, %v1840
    %v1889 = vsub.f32 %v1739, %v1841
    %v1890 = vsub.f32 %v1744, %v1842
    %v1891 = vsub.f32 %v1749, %v1843
    %v1892 = vsub.f32 %v1754, %v1844
    %v1893 = vsub.f32 %v1759, %v1845
    %v1894 = vsub.f32 %v1764, %v1846
    %v1895 = vsub.f32 %v1769, %v1847
    %v1896 = vsub.f32 %v1774, %v1848
    %v1897 = vsub.f32 %v1779, %v1849
    %v1898 = vsub.f32 %v1784, %v1850
    %v1899 = vsub.f32 %v1789, %v1851
    %v1900 = vsub.f32 %v1794, %v1852
    %v1901 = vsub.f32 %v1799, %v1853
    %v1902 = vsub.f32 %v1804, %v1854
    %v1903 = vmul.f32 %v1839, 2.0
    %v1904 = vmul.f32 %v1840, 2.0
    %v1905 = vmul.f32 %v1841, 2.0
    %v1906 = vmul.f32 %v1842, 2.0
    %v1907 = vmul.f32 %v1843, 2.0
    %v1908 = vmul.f32 %v1844, 2.0
    %v1909 = vmul.f32 %v1845, 2.0
    %v1910 = vmul.f32 %v1846, 2.0
    %v1911 = vmul.f32 %v1847, 2.0
    %v1912 = vmul.f32 %v1848, 2.0
    %v1913 = vmul.f32 %v1849, 2.0
    %v1914 = vmul.f32 %v1850, 2.0
    %v1915 = vmul.f32 %v1851, 2.0
    %v1916 = vmul.f32 %v1852, 2.0
    %v1917 = vmul.f32 %v1853, 2.0
    %v1918 = vmul.f32 %v1854, 2.0
    %v1919 = vadd.f32 %v1903, 0.0001
    %v1920 = vadd.f32 %v1904, 0.0001
    %v1921 = vadd.f32 %v1905, 0.0001
    %v1922 = vadd.f32 %v1906, 0.0001
    %v1923 = vadd.f32 %v1907, 0.0001
    %v1924 = vadd.f32 %v1908, 0.0001
    %v1925 = vadd.f32 %v1909, 0.0001
    %v1926 = vadd.f32 %v1910, 0.0001
    %v1927 = vadd.f32 %v1911, 0.0001
    %v1928 = vadd.f32 %v1912, 0.0001
    %v1929 = vadd.f32 %v1913, 0.0001
    %v1930 = vadd.f32 %v1914, 0.0001
    %v1931 = vadd.f32 %v1915, 0.0001
    %v1932 = vadd.f32 %v1916, 0.0001
    %v1933 = vadd.f32 %v1917, 0.0001
    %v1934 = vadd.f32 %v1918, 0.0001
    %v1935 = vmul.f32 %v1887, 2.0
    %v1936 = vmul.f32 %v1888, 2.0
    %v1937 = vmul.f32 %v1889, 2.0
    %v1938 = vmul.f32 %v1890, 2.0
    %v1939 = vmul.f32 %v1891, 2.0
    %v1940 = vmul.f32 %v1892, 2.0
    %v1941 = vmul.f32 %v1893, 2.0
    %v1942 = vmul.f32 %v1894, 2.0
    %v1943 = vmul.f32 %v1895, 2.0
    %v1944 = vmul.f32 %v1896, 2.0
    %v1945 = vmul.f32 %v1897, 2.0
    %v1946 = vmul.f32 %v1898, 2.0
    %v1947 = vmul.f32 %v1899, 2.0
    %v1948 = vmul.f32 %v1900, 2.0
    %v1949 = vmul.f32 %v1901, 2.0
    %v1950 = vmul.f32 %v1902, 2.0
    %v1951 = vadd.f32 %v1935, 0.0009
    %v1952 = vadd.f32 %v1936, 0.0009
    %v1953 = vadd.f32 %v1937, 0.0009
    %v1954 = vadd.f32 %v1938, 0.0009
    %v1955 = vadd.f32 %v1939, 0.0009
    %v1956 = vadd.f32 %v1940, 0.0009
    %v1957 = vadd.f32 %v1941, 0.0009
    %v1958 = vadd.f32 %v1942, 0.0009
    %v1959 = vadd.f32 %v1943, 0.0009
    %v1960 = vadd.f32 %v1944, 0.0009
    %v1961 = vadd.f32 %v1945, 0.0009
    %v1962 = vadd.f32 %v1946, 0.0009
    %v1963 = vadd.f32 %v1947, 0.0009
    %v1964 = vadd.f32 %v1948, 0.0009
    %v1965 = vadd.f32 %v1949, 0.0009
    %v1966 = vadd.f32 %v1950, 0.0009
    %v1967 = vmul.f32 %v1919, %v1951
    %v1968 = vmul.f32 %v1920, %v1952
    %v1969 = vmul.f32 %v1921, %v1953
    %v1970 = vmul.f32 %v1922, %v1954
    %v1971 = vmul.f32 %v1923, %v1955
    %v1972 = vmul.f32 %v1924, %v1956
    %v1973 = vmul.f32 %v1925, %v1957
    %v1974 = vmul.f32 %v1926, %v1958
    %v1975 = vmul.f32 %v1927, %v1959
    %v1976 = vmul.f32 %v1928, %v1960
    %v1977 = vmul.f32 %v1929, %v1961
    %v1978 = vmul.f32 %v1930, %v1962
    %v1979 = vmul.f32 %v1931, %v1963
    %v1980 = vmul.f32 %v1932, %v1964
    %v1981 = vmul.f32 %v1933, %v1965
    %v1982 = vmul.f32 %v1934, %v1966
    %v1983 = vadd.f32 %v1807, %v1823
    %v1984 = vadd.f32 %v1808, %v1824
    %v1985 = vadd.f32 %v1809, %v1825
    %v1986 = vadd.f32 %v1810, %v1826
    %v1987 = vadd.f32 %v1811, %v1827
    %v1988 = vadd.f32 %v1812, %v1828
    %v1989 = vadd.f32 %v1813, %v1829
    %v1990 = vadd.f32 %v1814, %v1830
    %v1991 = vadd.f32 %v1815, %v1831
    %v1992 = vadd.f32 %v1816, %v1832
    %v1993 = vadd.f32 %v1817, %v1833
    %v1994 = vadd.f32 %v1818, %v1834
    %v1995 = vadd.f32 %v1819, %v1835
    %v1996 = vadd.f32 %v1820, %v1836
    %v1997 = vadd.f32 %v1821, %v1837
    %v1998 = vadd.f32 %v1822, %v1838
    %v1999 = vadd.f32 %v1983, 0.0001
    %v2000 = vadd.f32 %v1984, 0.0001
    %v2001 = vadd.f32 %v1985, 0.0001
    %v2002 = vadd.f32 %v1986, 0.0001
    %v2003 = vadd.f32 %v1987, 0.0001
    %v2004 = vadd.f32 %v1988, 0.0001
    %v2005 = vadd.f32 %v1989, 0.0001
    %v2006 = vadd.f32 %v1990, 0.0001
    %v2007 = vadd.f32 %v1991, 0.0001
    %v2008 = vadd.f32 %v1992, 0.0001
    %v2009 = vadd.f32 %v1993, 0.0001
    %v2010 = vadd.f32 %v1994, 0.0001
    %v2011 = vadd.f32 %v1995, 0.0001
    %v2012 = vadd.f32 %v1996, 0.0001
    %v2013 = vadd.f32 %v1997, 0.0001
    %v2014 = vadd.f32 %v1998, 0.0001
    %v2015 = vadd.f32 %v1855, %v1871
    %v2016 = vadd.f32 %v1856, %v1872
    %v2017 = vadd.f32 %v1857, %v1873
    %v2018 = vadd.f32 %v1858, %v1874
    %v2019 = vadd.f32 %v1859, %v1875
    %v2020 = vadd.f32 %v1860, %v1876
    %v2021 = vadd.f32 %v1861, %v1877
    %v2022 = vadd.f32 %v1862, %v1878
    %v2023 = vadd.f32 %v1863, %v1879
    %v2024 = vadd.f32 %v1864, %v1880
    %v2025 = vadd.f32 %v1865, %v1881
    %v2026 = vadd.f32 %v1866, %v1882
    %v2027 = vadd.f32 %v1867, %v1883
    %v2028 = vadd.f32 %v1868, %v1884
    %v2029 = vadd.f32 %v1869, %v1885
    %v2030 = vadd.f32 %v1870, %v1886
    %v2031 = vadd.f32 %v2015, 0.0009
    %v2032 = vadd.f32 %v2016, 0.0009
    %v2033 = vadd.f32 %v2017, 0.0009
    %v2034 = vadd.f32 %v2018, 0.0009
    %v2035 = vadd.f32 %v2019, 0.0009
    %v2036 = vadd.f32 %v2020, 0.0009
    %v2037 = vadd.f32 %v2021, 0.0009
    %v2038 = vadd.f32 %v2022, 0.0009
    %v2039 = vadd.f32 %v2023, 0.0009
    %v2040 = vadd.f32 %v2024, 0.0009
    %v2041 = vadd.f32 %v2025, 0.0009
    %v2042 = vadd.f32 %v2026, 0.0009
    %v2043 = vadd.f32 %v2027, 0.0009
    %v2044 = vadd.f32 %v2028, 0.0009
    %v2045 = vadd.f32 %v2029, 0.0009
    %v2046 = vadd.f32 %v2030, 0.0009
    %v2047 = vmul.f32 %v1999, %v2031
    %v2048 = vmul.f32 %v2000, %v2032
    %v2049 = vmul.f32 %v2001, %v2033
    %v2050 = vmul.f32 %v2002, %v2034
    %v2051 = vmul.f32 %v2003, %v2035
    %v2052 = vmul.f32 %v2004, %v2036
    %v2053 = vmul.f32 %v2005, %v2037
    %v2054 = vmul.f32 %v2006, %v2038
    %v2055 = vmul.f32 %v2007, %v2039
    %v2056 = vmul.f32 %v2008, %v2040
    %v2057 = vmul.f32 %v2009, %v2041
    %v2058 = vmul.f32 %v2010, %v2042
    %v2059 = vmul.f32 %v2011, %v2043
    %v2060 = vmul.f32 %v2012, %v2044
    %v2061 = vmul.f32 %v2013, %v2045
    %v2062 = vmul.f32 %v2014, %v2046
    %v2063 = vrcp.pop %v2047
    %v2064 = vmul.f32 %v1967, %v2063
    %v2065 = vrcp.pop %v2048
    %v2066 = vmul.f32 %v1968, %v2065
    %v2067 = vrcp.pop %v2049
    %v2068 = vmul.f32 %v1969, %v2067
    %v2069 = vrcp.pop %v2050
    %v2070 = vmul.f32 %v1970, %v2069
    %v2071 = vrcp.pop %v2051
    %v2072 = vmul.f32 %v1971, %v2071
    %v2073 = vrcp.pop %v2052
    %v2074 = vmul.f32 %v1972, %v2073
    %v2075 = vrcp.pop %v2053
    %v2076 = vmul.f32 %v1973, %v2075
    %v2077 = vrcp.pop %v2054
    %v2078 = vmul.f32 %v1974, %v2077
    %v2079 = vrcp.pop %v2055
    %v2080 = vmul.f32 %v1975, %v2079
    %v2081 = vrcp.pop %v2056
    %v2082 = vmul.f32 %v1976, %v2081
    %v2083 = vrcp.pop %v2057
    %v2084 = vmul.f32 %v1977, %v2083
    %v2085 = vrcp.pop %v2058
    %v2086 = vmul.f32 %v1978, %v2085
    %v2087 = vrcp.pop %v2059
    %v2088 = vmul.f32 %v1979, %v2087
    %v2089 = vrcp.pop %v2060
    %v2090 = vmul.f32 %v1980, %v2089
    %v2091 = vrcp.pop %v2061
    %v2092 = vmul.f32 %v1981, %v2091
    %v2093 = vrcp.pop %v2062
    %v2094 = vmul.f32 %v1982, %v2093
    %v2095 = vsel %vm68, %v2064, 0.0
    %v2096 = vsel %vm68, %v2066, 0.0
    %v2097 = vadd.f32 %v2095, %v2096
    %v2098 = vsel %vm68, %v2068, 0.0
    %v2099 = vadd.f32 %v2097, %v2098
    %v2100 = vsel %vm68, %v2070, 0.0
    %v2101 = vadd.f32 %v2099, %v2100
    %v2102 = vsel %vm68, %v2072, 0.0
    %v2103 = vadd.f32 %v2101, %v2102
    %v2104 = vsel %vm68, %v2074, 0.0
    %v2105 = vadd.f32 %v2103, %v2104
    %v2106 = vsel %vm68, %v2076, 0.0
    %v2107 = vadd.f32 %v2105, %v2106
    %v2108 = vsel %vm68, %v2078, 0.0
    %v2109 = vadd.f32 %v2107, %v2108
    %v2110 = vsel %vm68, %v2080, 0.0
    %v2111 = vadd.f32 %v2109, %v2110
    %v2112 = vsel %vm68, %v2082, 0.0
    %v2113 = vadd.f32 %v2111, %v2112
    %v2114 = vsel %vm68, %v2084, 0.0
    %v2115 = vadd.f32 %v2113, %v2114
    %v2116 = vsel %vm68, %v2086, 0.0
    %v2117 = vadd.f32 %v2115, %v2116
    %v2118 = vsel %vm68, %v2088, 0.0
    %v2119 = vadd.f32 %v2117, %v2118
    %v2120 = vsel %vm68, %v2090, 0.0
    %v2121 = vadd.f32 %v2119, %v2120
    %v2122 = vsel %vm68, %v2092, 0.0
    %v2123 = vadd.f32 %v2121, %v2122
    %v2124 = vsel %vm68, %v2094, 0.0
    %v2125 = vadd.f32 %v2123, %v2124
    %2126 = vadd.xlane.f32.xlu0 %v2125
    %v2127 = vpop.xlane.xlu0 %2126
    %v2128 = vrot.slane %v2127, 4
    %v2129 = vadd.f32 %v2127, %v2128
    %v2130 = vrot.slane %v2129, 2
    %v2131 = vadd.f32 %v2129, %v2130
    %v2132 = vrot.slane %v2131, 1
    %v2133 = vadd.f32 %v2131, %v2132
    %s2134 = vtos %v2133
    %v2135 = vstv %s2134
    %2136 = vst [vmem:[#allocation2] sm:$0xff] %v2135
    // Predicated region
    $region18: #{tpu_custom_call.1} parent=1 // pred_check
      _
    $region19: #{tpu_custom_call.1} parent=1 // pred_check_branch
      %2138 = sbr.rel (0) target = $region21
    $region20: #{tpu_custom_call.1} parent=1 // pred_region
      %s2140 = ssub.s32 128, 128
      %2141 = vsyncadd [#allocation3], %s2140
      %s2143 = sshll.u32 [#allocation2], 4
      %s2144 = int_to_ptr.vmem [resolvable:$true] %s2143
      %2146 = dma.vmem_to_hbm [thread:$0]  %s2144, 128, %s4, [#allocation3]
    $region21: #{tpu_custom_call.1} parent=1 // pred_fallthru
      _
    // Predicated region
    $region22: #{tpu_custom_call.1} parent=1 // pred_check
      _
    $region23: #{tpu_custom_call.1} parent=1 // pred_check_branch
      %2148 = sbr.rel (0) target = $region25
    $region24: #{tpu_custom_call.1} parent=1 // pred_region
      %2149 = dma.done [#allocation3], 128
    $region25: #{tpu_custom_call.1} parent=1 // pred_fallthru
      _
    %2150 = vsyncpa [#allocation3], 1

</llo_original>
